<compile_context>
chip_gen: v7x
topology: tpu7x:2x2x1
jax: 0.10.0
libtpu: 0.0.40
codegen_flags: <defaults>
</compile_context>

<pallas_src>
import jax
import jax.numpy as jnp
import numpy as np
from jax.experimental import pallas as pl
from jax.experimental.pallas import tpu as pltpu


def _round_up(x, m):
    return (x + m - 1) // m * m


def _cdiv(a, b):
    return -(-a // b)


# ----------------------------- Pallas kernel --------------------------------

def _build_qlinear_kernel(n_pad, acc_in_output):
    """Kernel computing one (tm, 4*n_pad) tile of the fused quaternion output.

    Grid = (Mp/tm, Kp/tk); axis 1 (quaternion in_features) is the reduction axis.
    Refs: 4x x-component (tm, tk), 4x weight (tk, n_pad), bias (1, 4*n_pad),
          fused output (tm, 4*n_pad), plus an f32 scratch accumulator when the
          output dtype is not f32.
    """
    col = [slice(c * n_pad, (c + 1) * n_pad) for c in range(4)]  # static, lane-aligned

    def kernel(xr_ref, xi_ref, xj_ref, xk_ref,
               wr_ref, wi_ref, wj_ref, wk_ref,
               b_ref, o_ref, *scratch):
        k = pl.program_id(1)
        acc_ref = o_ref if acc_in_output else scratch[0]

        @pl.when(k == 0)
        def _init():
            if acc_in_output:
                # Output block is f32 and stays VMEM-resident across k: seed it
                # with the bias so no separate finalize pass is needed.
                o_ref[...] = jnp.broadcast_to(b_ref[...], o_ref.shape)
            else:
                acc_ref[...] = jnp.zeros_like(acc_ref)

        xr, xi, xj, xk = xr_ref[...], xi_ref[...], xj_ref[...], xk_ref[...]
        wr, wi, wj, wk = wr_ref[...], wi_ref[...], wj_ref[...], wk_ref[...]

        def dot(a, b):
            return jnp.dot(a, b, preferred_element_type=jnp.float32)

        # Hamilton-product block structure of W_big applied as 16 sign-flipped MXU
        # dots on the four (in, out) quaternion weights; W_big is never materialized.
        acc_ref[:, col[0]] += dot(xr, wr) - dot(xi, wi) - dot(xj, wj) - dot(xk, wk)
        acc_ref[:, col[1]] += dot(xr, wi) + dot(xi, wr) - dot(xj, wk) + dot(xk, wj)
        acc_ref[:, col[2]] += dot(xr, wj) + dot(xi, wk) + dot(xj, wr) - dot(xk, wi)
        acc_ref[:, col[3]] += dot(xr, wk) - dot(xi, wj) + dot(xj, wi) + dot(xk, wr)

        if not acc_in_output:
            @pl.when(k == pl.num_programs(1) - 1)
            def _finalize():
                o_ref[...] = (acc_ref[...] + b_ref[...]).astype(o_ref.dtype)

    return kernel


# --------------------------- Tile / VMEM selection ---------------------------

_VMEM_TILE_BUDGET = 28 * 1024 * 1024   # target live VMEM; v7x has only 64 MiB / TC


def _choose_tiles(m, k_pad, n_pad, x_item, w_item, out_item, acc_in_output,
                  tm_target=256):
    """Pick (tm, Mp, tk) so padding waste stays small and VMEM stays bounded.

    tm is chosen from the actual number of row blocks (avoids e.g. M=300 -> Mp=512);
    tk is a multiple of 128 that divides Kp (avoids e.g. in_f=384 -> Kp=512 waste),
    preferring tk == Kp so the weights are DMA'd once and stay VMEM-resident.
    """
    tm_target = max(int(tm_target), 16)

    def row_tile(cap):
        g = _cdiv(m, cap)
        tm = _round_up(_cdiv(m, g), 16)
        return tm, tm * g

    def vmem_estimate(tm, tk):
        return (2 * 4 * tm * tk * x_item               # 4 x-components, double-buffered
                + 2 * 4 * tk * n_pad * w_item          # 4 weights
                + 2 * 4 * n_pad * 4                    # bias
                + 2 * tm * 4 * n_pad * out_item        # fused output block
                + (0 if acc_in_output else tm * 4 * n_pad * 4))

    nkb = k_pad // 128
    divisors = [d for d in range(nkb, 0, -1) if nkb % d == 0]   # descending
    caps = sorted({tm_target} | {min(tm_target, c) for c in (256, 128, 64, 32, 16)},
                  reverse=True)

    for cap in caps:
        tm, m_pad = row_tile(cap)
        for d in divisors:
            tk = 128 * d
            est = vmem_estimate(tm, tk)
            if est <= _VMEM_TILE_BUDGET:
                return tm, m_pad, tk, est
    tm, m_pad = row_tile(caps[-1])
    return tm, m_pad, 128, vmem_estimate(tm, 128)


# ------------------------------- pallas_call ---------------------------------

def _qlinear_pallas(x2, wr, wi, wj, wk, bias2, *, m_pad, k_pad, n_pad, tm, tk,
                    out_dtype, acc_in_output, vmem_est):
    """x2: (Mp, 4*Kp) component-major activations; w*: (Kp, Np); bias2: (1, 4*Np)."""
    grid = (m_pad // tm, k_pad // tk)
    nk = k_pad // tk

    # Four views into the same activation buffer: component c lives at column
    # block offset c*nk.  Each DMA is a contiguous, lane-dense (tm, tk) tile.
    x_specs = [pl.BlockSpec((tm, tk), (lambda i, k, c=c: (i, c * nk + k)))
               for c in range(4)]
    # Full-width weight blocks; when nk == 1 the index_map is constant so the
    # weights are fetched into VMEM once and stay resident for the whole grid.
    w_spec = pl.BlockSpec((tk, n_pad), lambda i, k: (k, 0))
    b_spec = pl.BlockSpec((1, 4 * n_pad), lambda i, k: (0, 0))
    # Fused output block: constant across k -> VMEM-resident accumulator.
    o_spec = pl.BlockSpec((tm, 4 * n_pad), lambda i, k: (i, 0))

    x_item = x2.dtype.itemsize
    w_item = wr.dtype.itemsize
    out_item = jnp.dtype(out_dtype).itemsize
    w_streams = 1 if nk == 1 else (m_pad // tm)   # weight re-streaming only if K is tiled
    cost = pl.CostEstimate(
        flops=int(2 * 16 * m_pad * k_pad * n_pad),
        transcendentals=0,
        bytes_accessed=int(m_pad * 4 * k_pad * x_item
                           + w_streams * 4 * k_pad * n_pad * w_item
                           + m_pad * 4 * n_pad * out_item
                           + 4 * 4 * n_pad),
    )

    # Leave headroom below v7x's 64 MiB physical VMEM (never request it all).
    vmem_limit = int(min(max(int(1.3 * vmem_est) + (2 << 20), 32 << 20), 56 << 20))

    scratch = [] if acc_in_output else [pltpu.VMEM((tm, 4 * n_pad), jnp.float32)]
    kernel = _build_qlinear_kernel(n_pad, acc_in_output)

    return pl.pallas_call(
        kernel,
        out_shape=jax.ShapeDtypeStruct((m_pad, 4 * n_pad), out_dtype),
        grid_spec=pltpu.PrefetchScalarGridSpec(
            num_scalar_prefetch=0,
            grid=grid,
            in_specs=x_specs + [w_spec, w_spec, w_spec, w_spec, b_spec],
            out_specs=o_spec,
            scratch_shapes=scratch,
        ),
        compiler_params=pltpu.CompilerParams(
            dimension_semantics=("parallel", "arbitrary"),
            vmem_limit_bytes=vmem_limit,
        ),
        cost_estimate=cost,
    )(x2, x2, x2, x2, wr, wi, wj, wk, bias2)


# --------------------------------- Wrappers -----------------------------------

def prepare_qlinear_params(r_w, i_w, j_w, k_w, bias, *, compute_dtype=jnp.bfloat16):
    """Hoists the per-call weight cast + pad out of the forward path.

    Weights are stored padded to (Kp, Np) (multiples of 128) in compute_dtype;
    the bias is stored as a (1, 4*Np) float32 row matching the fused output layout.
    The returned dict is meant to be closed over (not passed as a jit argument).
    """
    in_f, out_f = r_w.shape
    k_pad = _round_up(in_f, 128)
    n_pad = _round_up(out_f, 128)

    def prep_w(w):
        return jnp.pad(w.astype(compute_dtype),
                       ((0, k_pad - in_f), (0, n_pad - out_f)))

    bias2 = jnp.pad(bias.reshape(4, out_f).astype(jnp.float32),
                    ((0, 0), (0, n_pad - out_f))).reshape(1, 4 * n_pad)
    return dict(wr=prep_w(r_w), wi=prep_w(i_w), wj=prep_w(j_w), wk=prep_w(k_w),
                bias2=bias2, in_features=in_f, out_features=out_f,
                k_pad=k_pad, n_pad=n_pad,
                compute_dtype=jnp.dtype(compute_dtype))


def qlinear_apply(params, x, *, tm=256):
    """y = x @ W_big + b for x of shape (..., 4*in_features), features [R|I|J|K].

    Output has shape (..., 4*out_features) and keeps x.dtype (accumulation and
    the bias add are always float32).  `tm` may be raised (e.g. 512 on v6e's
    larger VMEM); 256 matches the v7x MXU and its 64 MiB VMEM.
    """
    in_f, out_f = params["in_features"], params["out_features"]
    k_pad, n_pad = params["k_pad"], params["n_pad"]
    compute_dtype = params["compute_dtype"]

    lead, feat = x.shape[:-1], x.shape[-1]
    assert feat == 4 * in_f, "quaternion input feature dim must equal 4*in_features"
    m = int(np.prod(lead)) if lead else 1
    out_dtype = x.dtype
    acc_in_output = (out_dtype == jnp.float32)

    tm_sel, m_pad, tk, vmem_est = _choose_tiles(
        m, k_pad, n_pad,
        jnp.dtype(compute_dtype).itemsize, jnp.dtype(compute_dtype).itemsize,
        jnp.dtype(out_dtype).itemsize, acc_in_output, tm_target=tm)

    # Single cast; pad only when shapes require it (when in_f is already a
    # multiple of 128 and m == m_pad this is pure metadata: no activation copy).
    x2 = x.reshape(m, feat).astype(compute_dtype)
    if m_pad != m or k_pad != in_f:
        x4 = x2.reshape(m, 4, in_f)
        x4 = jnp.pad(x4, ((0, m_pad - m), (0, 0), (0, k_pad - in_f)))
        x2 = x4.reshape(m_pad, 4 * k_pad)

    y = _qlinear_pallas(x2, params["wr"], params["wi"], params["wj"], params["wk"],
                        params["bias2"], m_pad=m_pad, k_pad=k_pad, n_pad=n_pad,
                        tm=tm_sel, tk=tk, out_dtype=out_dtype,
                        acc_in_output=acc_in_output, vmem_est=vmem_est)

    # The kernel already produced the fused [R | I | J | K] layout; only slice
    # off padding when it exists (no jnp.concatenate pass anymore).
    if m_pad != m or n_pad != out_f:
        y = y.reshape(m_pad, 4, n_pad)[:m, :, :out_f].reshape(m, 4 * out_f)
    return y.reshape(*lead, 4 * out_f)


def qlinear_forward(x, r_w, i_w, j_w, k_w, bias, *, compute_dtype=jnp.bfloat16, tm=256):
    """One-shot convenience wrapper (prepares params every call; prefer
    prepare_qlinear_params + qlinear_apply in real use)."""
    params = prepare_qlinear_params(r_w, i_w, j_w, k_w, bias,
                                    compute_dtype=compute_dtype)
    return qlinear_apply(params, x, tm=tm)


# --------------------------- Parameter setup (glue) --------------------------

def quaternion_init(key, in_features, out_features, criterion="glorot"):
    """Deterministic quaternion polar-form init (simplified chi draw)."""
    fan_in, fan_out = in_features, out_features
    if criterion == "glorot":
        s = 1.0 / np.sqrt(2.0 * (fan_in + fan_out))
    else:  # he
        s = 1.0 / np.sqrt(2.0 * fan_in)
    k1, k2, k3, k4, k5 = jax.random.split(key, 5)
    shape = (in_features, out_features)
    g = jax.random.normal(k1, (4,) + shape)
    modulus = s * jnp.sqrt(jnp.sum(g * g, axis=0))
    phase = jax.random.uniform(k2, shape, minval=-np.pi, maxval=np.pi)
    v_i = jax.random.uniform(k3, shape, minval=-1.0, maxval=1.0)
    v_j = jax.random.uniform(k4, shape, minval=-1.0, maxval=1.0)
    v_k = jax.random.uniform(k5, shape, minval=-1.0, maxval=1.0)
    norm = jnp.sqrt(v_i ** 2 + v_j ** 2 + v_k ** 2) + 1e-4
    v_i, v_j, v_k = v_i / norm, v_j / norm, v_k / norm
    r = modulus * jnp.cos(phase)
    i = modulus * v_i * jnp.sin(phase)
    j = modulus * v_j * jnp.sin(phase)
    k = modulus * v_k * jnp.sin(phase)
    return (r.astype(jnp.float32), i.astype(jnp.float32),
            j.astype(jnp.float32), k.astype(jnp.float32))


def build_cat_kernel(r_w, i_w, j_w, k_w):
    """Reference-only: the materialized Hamilton block matrix of quaternion_linear_op.
    The Pallas kernel never builds this (it streams the 4 weights directly)."""
    cat_r = jnp.concatenate([r_w, -i_w, -j_w, -k_w], axis=0)
    cat_i = jnp.concatenate([i_w, r_w, -k_w, j_w], axis=0)
    cat_j = jnp.concatenate([j_w, k_w, r_w, -i_w], axis=0)
    cat_k = jnp.concatenate([k_w, -j_w, i_w, r_w], axis=0)
    return jnp.concatenate([cat_r, cat_i, cat_j, cat_k], axis=1)  # (4*in, 4*out)


# ---------------------------------- main -------------------------------------

if __name__ == "__main__":
    key = jax.random.PRNGKey(0)
    kx, kw, kb = jax.random.split(key, 3)

    batch, time = 2, 8
    in_features = 32          # quaternion in-features  -> input  feature dim 128
    n_neurons = 32            # quaternion out-neurons  -> output feature dim 128
    feat = 4 * in_features

    x = jax.random.normal(kx, (batch, time, feat), dtype=jnp.float32)
    r_w, i_w, j_w, k_w = quaternion_init(kw, in_features, n_neurons, criterion="glorot")
    # The module initializes bias to 0; use a small non-zero bias to exercise the
    # fused bias path (semantics are y = x @ W_big + b either way).
    bias = 0.1 * jax.random.normal(kb, (4 * n_neurons,), dtype=jnp.float32)

    # Ground-truth reference in float64 (same math as torch quaternion_linear_op).
    w_big = np.asarray(build_cat_kernel(r_w, i_w, j_w, k_w), dtype=np.float64)
    x64 = np.asarray(x, dtype=np.float64).reshape(batch * time, feat)
    ref = (x64 @ w_big + np.asarray(bias, dtype=np.float64)).reshape(
        batch, time, 4 * n_neurons)

    # Exact f32-operand path.
    out_f32 = jax.block_until_ready(
        qlinear_forward(x, r_w, i_w, j_w, k_w, bias, compute_dtype=jnp.float32))
    np.testing.assert_allclose(np.asarray(out_f32, dtype=np.float64), ref,
                               rtol=1e-4, atol=1e-4)
    assert out_f32.shape == (batch, time, 4 * n_neurons)
    assert out_f32.dtype == jnp.float32

    # Default bf16 MXU fast path with hoisted (pre-padded / pre-cast) weights,
    # jitted apply, f32 accumulation in the resident output block.
    params = prepare_qlinear_params(r_w, i_w, j_w, k_w, bias)   # bf16 operands
    fwd = jax.jit(lambda t: qlinear_apply(params, t))
    out_bf16 = jax.block_until_ready(fwd(x))
    np.testing.assert_allclose(np.asarray(out_bf16, dtype=np.float64), ref,
                               rtol=3e-2, atol=3e-2)

    # bf16 activations -> bf16 output (exercises the scratch-accumulator path).
    out_b = jax.block_until_ready(fwd(x.astype(jnp.bfloat16)))
    np.testing.assert_allclose(np.asarray(out_b, dtype=np.float64), ref,
                               rtol=5e-2, atol=5e-2)
    assert out_b.dtype == jnp.bfloat16

    print("KERNEL_OK")
</pallas_src>

<mosaic_0001>
module attributes {stable_mosaic.version = 11 : i64} {
  func.func @kernel(%arg0: i32, %arg1: i32, %arg2: memref<16x128xf32, #tpu.memory_space<vmem>>, %arg3: memref<16x128xf32, #tpu.memory_space<vmem>>, %arg4: memref<16x128xf32, #tpu.memory_space<vmem>>, %arg5: memref<16x128xf32, #tpu.memory_space<vmem>>, %arg6: memref<128x128xf32, #tpu.memory_space<vmem>>, %arg7: memref<128x128xf32, #tpu.memory_space<vmem>>, %arg8: memref<128x128xf32, #tpu.memory_space<vmem>>, %arg9: memref<128x128xf32, #tpu.memory_space<vmem>>, %arg10: memref<1x512xf32, #tpu.memory_space<vmem>>, %arg11: memref<16x512xf32, #tpu.memory_space<vmem>>) attributes {dimension_semantics = [#tpu.dimension_semantics<parallel>, #tpu.dimension_semantics<arbitrary>], iteration_bounds = array<i64: 1, 1>, scalar_prefetch = 0 : i64, scratch_operands = 0 : i64, tpu.core_type = #tpu.core_type<tc>, window_params = [{transform_indices = @transform_0, window_bounds = array<i64: 16, 128>}, {transform_indices = @transform_1, window_bounds = array<i64: 16, 128>}, {transform_indices = @transform_2, window_bounds = array<i64: 16, 128>}, {transform_indices = @transform_3, window_bounds = array<i64: 16, 128>}, {transform_indices = @transform_4, window_bounds = array<i64: 128, 128>}, {transform_indices = @transform_5, window_bounds = array<i64: 128, 128>}, {transform_indices = @transform_6, window_bounds = array<i64: 128, 128>}, {transform_indices = @transform_7, window_bounds = array<i64: 128, 128>}, {pipeline_mode = #tpu.pipeline_mode<synchronous>, transform_indices = @transform_8, window_bounds = array<i64: 1, 512>}, {transform_indices = @transform_9, window_bounds = array<i64: 16, 512>}]} {
    %c0_i32 = arith.constant 0 : i32
    %0 = arith.cmpi eq, %arg1, %c0_i32 : i32
    %1 = arith.extui %0 : i1 to i32
    %c0_i32_0 = arith.constant 0 : i32
    %2 = arith.cmpi ne, %1, %c0_i32_0 : i32
    scf.if %2 {
      %c0_44 = arith.constant 0 : index
      %c0_45 = arith.constant 0 : index
      %51 = vector.load %arg10[%c0_44, %c0_45] : memref<1x512xf32, #tpu.memory_space<vmem>>, vector<1x512xf32>
      %52 = vector.shape_cast %51 : vector<1x512xf32> to vector<1x512xf32>
      %53 = vector.broadcast %52 : vector<1x512xf32> to vector<16x512xf32>
      %c0_46 = arith.constant 0 : index
      %c0_47 = arith.constant 0 : index
      %54 = vector.load %arg11[%c0_46, %c0_47] : memref<16x512xf32, #tpu.memory_space<vmem>>, vector<16x512xf32>
      tpu.vector_store %arg11[%c0_46, %c0_47], %53 {strides = array<i32>} : memref<16x512xf32, #tpu.memory_space<vmem>>, vector<16x512xf32>,
    } else {
    }
    %c0 = arith.constant 0 : index
    %c0_1 = arith.constant 0 : index
    %3 = vector.load %arg2[%c0, %c0_1] : memref<16x128xf32, #tpu.memory_space<vmem>>, vector<16x128xf32>
    %c0_2 = arith.constant 0 : index
    %c0_3 = arith.constant 0 : index
    %4 = vector.load %arg3[%c0_2, %c0_3] : memref<16x128xf32, #tpu.memory_space<vmem>>, vector<16x128xf32>
    %c0_4 = arith.constant 0 : index
    %c0_5 = arith.constant 0 : index
    %5 = vector.load %arg4[%c0_4, %c0_5] : memref<16x128xf32, #tpu.memory_space<vmem>>, vector<16x128xf32>
    %c0_6 = arith.constant 0 : index
    %c0_7 = arith.constant 0 : index
    %6 = vector.load %arg5[%c0_6, %c0_7] : memref<16x128xf32, #tpu.memory_space<vmem>>, vector<16x128xf32>
    %c0_8 = arith.constant 0 : index
    %c0_9 = arith.constant 0 : index
    %7 = vector.load %arg6[%c0_8, %c0_9] : memref<128x128xf32, #tpu.memory_space<vmem>>, vector<128x128xf32>
    %c0_10 = arith.constant 0 : index
    %c0_11 = arith.constant 0 : index
    %8 = vector.load %arg7[%c0_10, %c0_11] : memref<128x128xf32, #tpu.memory_space<vmem>>, vector<128x128xf32>
    %c0_12 = arith.constant 0 : index
    %c0_13 = arith.constant 0 : index
    %9 = vector.load %arg8[%c0_12, %c0_13] : memref<128x128xf32, #tpu.memory_space<vmem>>, vector<128x128xf32>
    %c0_14 = arith.constant 0 : index
    %c0_15 = arith.constant 0 : index
    %10 = vector.load %arg9[%c0_14, %c0_15] : memref<128x128xf32, #tpu.memory_space<vmem>>, vector<128x128xf32>
    %c0_16 = arith.constant 0 : index
    %c0_17 = arith.constant 0 : index
    %11 = vector.load %arg11[%c0_16, %c0_17] : memref<16x512xf32, #tpu.memory_space<vmem>>, vector<16x128xf32>
    %cst = arith.constant dense<0.000000e+00> : vector<16x128xf32>
    %12 = tpu.matmul %3, %7, %cst {dimension_numbers = #tpu.dot_dimension_numbers<[1], [0], [0], [1], [0, 0, 1, 1], [], []>} : vector<16x128xf32>, vector<128x128xf32>, vector<16x128xf32> -> vector<16x128xf32>
    %cst_18 = arith.constant dense<0.000000e+00> : vector<16x128xf32>
    %13 = tpu.matmul %4, %8, %cst_18 {dimension_numbers = #tpu.dot_dimension_numbers<[1], [0], [0], [1], [0, 0, 1, 1], [], []>} : vector<16x128xf32>, vector<128x128xf32>, vector<16x128xf32> -> vector<16x128xf32>
    %14 = arith.subf %12, %13 : vector<16x128xf32>
    %cst_19 = arith.constant dense<0.000000e+00> : vector<16x128xf32>
    %15 = tpu.matmul %5, %9, %cst_19 {dimension_numbers = #tpu.dot_dimension_numbers<[1], [0], [0], [1], [0, 0, 1, 1], [], []>} : vector<16x128xf32>, vector<128x128xf32>, vector<16x128xf32> -> vector<16x128xf32>
    %16 = arith.subf %14, %15 : vector<16x128xf32>
    %cst_20 = arith.constant dense<0.000000e+00> : vector<16x128xf32>
    %17 = tpu.matmul %6, %10, %cst_20 {dimension_numbers = #tpu.dot_dimension_numbers<[1], [0], [0], [1], [0, 0, 1, 1], [], []>} : vector<16x128xf32>, vector<128x128xf32>, vector<16x128xf32> -> vector<16x128xf32>
    %18 = arith.subf %16, %17 : vector<16x128xf32>
    %19 = arith.addf %11, %18 : vector<16x128xf32>
    %c0_21 = arith.constant 0 : index
    %c0_22 = arith.constant 0 : index
    %20 = vector.load %arg11[%c0_21, %c0_22] : memref<16x512xf32, #tpu.memory_space<vmem>>, vector<16x128xf32>
    tpu.vector_store %arg11[%c0_21, %c0_22], %19 {strides = array<i32>} : memref<16x512xf32, #tpu.memory_space<vmem>>, vector<16x128xf32>,
    %c0_23 = arith.constant 0 : index
    %c128 = arith.constant 128 : index
    %21 = vector.load %arg11[%c0_23, %c128] : memref<16x512xf32, #tpu.memory_space<vmem>>, vector<16x128xf32>
    %cst_24 = arith.constant dense<0.000000e+00> : vector<16x128xf32>
    %22 = tpu.matmul %3, %8, %cst_24 {dimension_numbers = #tpu.dot_dimension_numbers<[1], [0], [0], [1], [0, 0, 1, 1], [], []>} : vector<16x128xf32>, vector<128x128xf32>, vector<16x128xf32> -> vector<16x128xf32>
    %cst_25 = arith.constant dense<0.000000e+00> : vector<16x128xf32>
    %23 = tpu.matmul %4, %7, %cst_25 {dimension_numbers = #tpu.dot_dimension_numbers<[1], [0], [0], [1], [0, 0, 1, 1], [], []>} : vector<16x128xf32>, vector<128x128xf32>, vector<16x128xf32> -> vector<16x128xf32>
    %24 = arith.addf %22, %23 : vector<16x128xf32>
    %cst_26 = arith.constant dense<0.000000e+00> : vector<16x128xf32>
    %25 = tpu.matmul %5, %10, %cst_26 {dimension_numbers = #tpu.dot_dimension_numbers<[1], [0], [0], [1], [0, 0, 1, 1], [], []>} : vector<16x128xf32>, vector<128x128xf32>, vector<16x128xf32> -> vector<16x128xf32>
    %26 = arith.subf %24, %25 : vector<16x128xf32>
    %cst_27 = arith.constant dense<0.000000e+00> : vector<16x128xf32>
    %27 = tpu.matmul %6, %9, %cst_27 {dimension_numbers = #tpu.dot_dimension_numbers<[1], [0], [0], [1], [0, 0, 1, 1], [], []>} : vector<16x128xf32>, vector<128x128xf32>, vector<16x128xf32> -> vector<16x128xf32>
    %28 = arith.addf %26, %27 : vector<16x128xf32>
    %29 = arith.addf %21, %28 : vector<16x128xf32>
    %c0_28 = arith.constant 0 : index
    %c128_29 = arith.constant 128 : index
    %30 = vector.load %arg11[%c0_28, %c128_29] : memref<16x512xf32, #tpu.memory_space<vmem>>, vector<16x128xf32>
    tpu.vector_store %arg11[%c0_28, %c128_29], %29 {strides = array<i32>} : memref<16x512xf32, #tpu.memory_space<vmem>>, vector<16x128xf32>,
    %c0_30 = arith.constant 0 : index
    %c256 = arith.constant 256 : index
    %31 = vector.load %arg11[%c0_30, %c256] : memref<16x512xf32, #tpu.memory_space<vmem>>, vector<16x128xf32>
    %cst_31 = arith.constant dense<0.000000e+00> : vector<16x128xf32>
    %32 = tpu.matmul %3, %9, %cst_31 {dimension_numbers = #tpu.dot_dimension_numbers<[1], [0], [0], [1], [0, 0, 1, 1], [], []>} : vector<16x128xf32>, vector<128x128xf32>, vector<16x128xf32> -> vector<16x128xf32>
    %cst_32 = arith.constant dense<0.000000e+00> : vector<16x128xf32>
    %33 = tpu.matmul %4, %10, %cst_32 {dimension_numbers = #tpu.dot_dimension_numbers<[1], [0], [0], [1], [0, 0, 1, 1], [], []>} : vector<16x128xf32>, vector<128x128xf32>, vector<16x128xf32> -> vector<16x128xf32>
    %34 = arith.addf %32, %33 : vector<16x128xf32>
    %cst_33 = arith.constant dense<0.000000e+00> : vector<16x128xf32>
    %35 = tpu.matmul %5, %7, %cst_33 {dimension_numbers = #tpu.dot_dimension_numbers<[1], [0], [0], [1], [0, 0, 1, 1], [], []>} : vector<16x128xf32>, vector<128x128xf32>, vector<16x128xf32> -> vector<16x128xf32>
    %36 = arith.addf %34, %35 : vector<16x128xf32>
    %cst_34 = arith.constant dense<0.000000e+00> : vector<16x128xf32>
    %37 = tpu.matmul %6, %8, %cst_34 {dimension_numbers = #tpu.dot_dimension_numbers<[1], [0], [0], [1], [0, 0, 1, 1], [], []>} : vector<16x128xf32>, vector<128x128xf32>, vector<16x128xf32> -> vector<16x128xf32>
    %38 = arith.subf %36, %37 : vector<16x128xf32>
    %39 = arith.addf %31, %38 : vector<16x128xf32>
    %c0_35 = arith.constant 0 : index
    %c256_36 = arith.constant 256 : index
    %40 = vector.load %arg11[%c0_35, %c256_36] : memref<16x512xf32, #tpu.memory_space<vmem>>, vector<16x128xf32>
    tpu.vector_store %arg11[%c0_35, %c256_36], %39 {strides = array<i32>} : memref<16x512xf32, #tpu.memory_space<vmem>>, vector<16x128xf32>,
    %c0_37 = arith.constant 0 : index
    %c384 = arith.constant 384 : index
    %41 = vector.load %arg11[%c0_37, %c384] : memref<16x512xf32, #tpu.memory_space<vmem>>, vector<16x128xf32>
    %cst_38 = arith.constant dense<0.000000e+00> : vector<16x128xf32>
    %42 = tpu.matmul %3, %10, %cst_38 {dimension_numbers = #tpu.dot_dimension_numbers<[1], [0], [0], [1], [0, 0, 1, 1], [], []>} : vector<16x128xf32>, vector<128x128xf32>, vector<16x128xf32> -> vector<16x128xf32>
    %cst_39 = arith.constant dense<0.000000e+00> : vector<16x128xf32>
    %43 = tpu.matmul %4, %9, %cst_39 {dimension_numbers = #tpu.dot_dimension_numbers<[1], [0], [0], [1], [0, 0, 1, 1], [], []>} : vector<16x128xf32>, vector<128x128xf32>, vector<16x128xf32> -> vector<16x128xf32>
    %44 = arith.subf %42, %43 : vector<16x128xf32>
    %cst_40 = arith.constant dense<0.000000e+00> : vector<16x128xf32>
    %45 = tpu.matmul %5, %8, %cst_40 {dimension_numbers = #tpu.dot_dimension_numbers<[1], [0], [0], [1], [0, 0, 1, 1], [], []>} : vector<16x128xf32>, vector<128x128xf32>, vector<16x128xf32> -> vector<16x128xf32>
    %46 = arith.addf %44, %45 : vector<16x128xf32>
    %cst_41 = arith.constant dense<0.000000e+00> : vector<16x128xf32>
    %47 = tpu.matmul %6, %7, %cst_41 {dimension_numbers = #tpu.dot_dimension_numbers<[1], [0], [0], [1], [0, 0, 1, 1], [], []>} : vector<16x128xf32>, vector<128x128xf32>, vector<16x128xf32> -> vector<16x128xf32>
    %48 = arith.addf %46, %47 : vector<16x128xf32>
    %49 = arith.addf %41, %48 : vector<16x128xf32>
    %c0_42 = arith.constant 0 : index
    %c384_43 = arith.constant 384 : index
    %50 = vector.load %arg11[%c0_42, %c384_43] : memref<16x512xf32, #tpu.memory_space<vmem>>, vector<16x128xf32>
    tpu.vector_store %arg11[%c0_42, %c384_43], %49 {strides = array<i32>} : memref<16x512xf32, #tpu.memory_space<vmem>>, vector<16x128xf32>,
    return
  }
  func.func @transform_0(%arg0: i32, %arg1: i32) -> (i32, i32) {
    %c0_i32 = arith.constant 0 : i32
    %0 = arith.addi %c0_i32, %arg1 : i32
    %c0_i32_0 = arith.constant 0 : i32
    return %arg0, %0 : i32, i32
  }
  func.func @transform_1(%arg0: i32, %arg1: i32) -> (i32, i32) {
    %c1_i32 = arith.constant 1 : i32
    %0 = arith.addi %c1_i32, %arg1 : i32
    %c0_i32 = arith.constant 0 : i32
    return %arg0, %0 : i32, i32
  }
  func.func @transform_2(%arg0: i32, %arg1: i32) -> (i32, i32) {
    %c2_i32 = arith.constant 2 : i32
    %0 = arith.addi %c2_i32, %arg1 : i32
    %c0_i32 = arith.constant 0 : i32
    return %arg0, %0 : i32, i32
  }
  func.func @transform_3(%arg0: i32, %arg1: i32) -> (i32, i32) {
    %c3_i32 = arith.constant 3 : i32
    %0 = arith.addi %c3_i32, %arg1 : i32
    %c0_i32 = arith.constant 0 : i32
    return %arg0, %0 : i32, i32
  }
  func.func @transform_4(%arg0: i32, %arg1: i32) -> (i32, i32) {
    %c0_i32 = arith.constant 0 : i32
    %c0_i32_0 = arith.constant 0 : i32
    return %arg1, %c0_i32 : i32, i32
  }
  func.func @transform_5(%arg0: i32, %arg1: i32) -> (i32, i32) {
    %c0_i32 = arith.constant 0 : i32
    %c0_i32_0 = arith.constant 0 : i32
    return %arg1, %c0_i32 : i32, i32
  }
  func.func @transform_6(%arg0: i32, %arg1: i32) -> (i32, i32) {
    %c0_i32 = arith.constant 0 : i32
    %c0_i32_0 = arith.constant 0 : i32
    return %arg1, %c0_i32 : i32, i32
  }
  func.func @transform_7(%arg0: i32, %arg1: i32) -> (i32, i32) {
    %c0_i32 = arith.constant 0 : i32
    %c0_i32_0 = arith.constant 0 : i32
    return %arg1, %c0_i32 : i32, i32
  }
  func.func @transform_8(%arg0: i32, %arg1: i32) -> (i32, i32) {
    %c0_i32 = arith.constant 0 : i32
    %c0_i32_0 = arith.constant 0 : i32
    %c0_i32_1 = arith.constant 0 : i32
    return %c0_i32, %c0_i32_0 : i32, i32
  }
  func.func @transform_9(%arg0: i32, %arg1: i32) -> (i32, i32) {
    %c0_i32 = arith.constant 0 : i32
    %c0_i32_0 = arith.constant 0 : i32
    return %arg0, %c0_i32 : i32, i32
  }
}

</mosaic_0001>

<llo_original>
// kernel: tpu_custom_call.1
$region0: #{tpu_custom_call.1}
  #allocation0 [shape = 'u32[]', space=smem, size = 0x4, offset = 0x4, fixed_abs, tag = 'smem constant byte address 0x4 - core index']
  #allocation1 [shape = 'u32[144,128]{1,0:T(1,128)}', space=vmem, size = 0x12000, scoped, tag = 'internal scratch']
  %s0 = inlined_call_operand.hbm [shape: f32[16,512], index: 0, kind: input, shape index: {}]
  %s1 = inlined_call_operand.hbm [shape: f32[16,512], index: 1, kind: input, shape index: {}]
  %s2 = inlined_call_operand.hbm [shape: f32[16,512], index: 2, kind: input, shape index: {}]
  %s3 = inlined_call_operand.hbm [shape: f32[16,512], index: 3, kind: input, shape index: {}]
  %s4 = inlined_call_operand.hbm [shape: f32[128,128], index: 4, kind: input, shape index: {}]
  %s5 = inlined_call_operand.hbm [shape: f32[128,128], index: 5, kind: input, shape index: {}]
  %s6 = inlined_call_operand.hbm [shape: f32[128,128], index: 6, kind: input, shape index: {}]
  %s7 = inlined_call_operand.hbm [shape: f32[128,128], index: 7, kind: input, shape index: {}]
  %s8 = inlined_call_operand.vmem [shape: f32[1,512], index: 8, kind: input, shape index: {}]
  %s9 = inlined_call_operand.hbm [shape: f32[16,512], index: 9, kind: output, shape index: {}]
  %s10 = sld [smem:[#allocation0]]
  $region82: #{tpu_custom_call.1} parent=0
    _
  %s12 = ssub.s32 1, %s10
  %s13 = scalar_select 0, %s12, %s10
  $region1: #{tpu_custom_call.1} parent=0
    #allocation2 [shape = 'u8[8192]{0}', space=vmem, size = 0x2000, scoped, tag = 'input window, operand 0, single buffered']
    #allocation3 [shape = 's32[1]{0}', space=sflag, size = 0x4, scoped, tag = 'scoped memory for tpu_custom_call.1']
    #allocation4 [shape = 's32[1]{0}', space=sflag, size = 0x4, scoped, tag = 'scoped memory for tpu_custom_call.1']
    #allocation5 [shape = 'u8[8192]{0}', space=vmem, size = 0x2000, scoped, tag = 'input window, operand 1, single buffered']
    #allocation6 [shape = 's32[1]{0}', space=sflag, size = 0x4, scoped, tag = 'scoped memory for tpu_custom_call.1']
    #allocation7 [shape = 'u8[8192]{0}', space=vmem, size = 0x2000, scoped, tag = 'input window, operand 2, single buffered']
    #allocation8 [shape = 'u8[8192]{0}', space=vmem, size = 0x2000, scoped, tag = 'input window, operand 3, single buffered']
    #allocation9 [shape = 's32[1]{0}', space=sflag, size = 0x4, scoped, tag = 'scoped memory for tpu_custom_call.1']
    #allocation10 [shape = 'u8[65536]{0}', space=vmem, size = 0x10000, scoped, tag = 'input window, operand 4, single buffered']
    #allocation11 [shape = 'u8[65536]{0}', space=vmem, size = 0x10000, scoped, tag = 'input window, operand 5, single buffered']
    #allocation12 [shape = 's32[1]{0}', space=sflag, size = 0x4, scoped, tag = 'scoped memory for tpu_custom_call.1']
    #allocation13 [shape = 'u8[65536]{0}', space=vmem, size = 0x10000, scoped, tag = 'input window, operand 6, single buffered']
    #allocation14 [shape = 'u8[65536]{0}', space=vmem, size = 0x10000, scoped, tag = 'input window, operand 7, single buffered']
    #allocation15 [shape = 's32[1]{0}', space=sflag, size = 0x4, scoped, tag = 'scoped memory for tpu_custom_call.1']
    #allocation16 [shape = 'u8[32768]{0}', space=vmem, size = 0x8000, scoped, tag = 'output window, operand 0, single buffered']
    %14 = vsyncpa [#allocation3], 0
    %15 = vsyncpa [#allocation6], 0
    %16 = vsyncpa [#allocation9], 0
    %17 = vsyncpa [#allocation12], 0
    %18 = vsyncpa [#allocation15], 0
    %19 = vsyncpa [#allocation4], 0
    // Predicated region
    $region2: #{tpu_custom_call.1} parent=1 // pred_check
      _
    $region3: #{tpu_custom_call.1} parent=1 // pred_check_branch
      %21 = sbr.rel (0) target = $region5
    $region4: #{tpu_custom_call.1} parent=1 // pred_region
      %s23 = ssub.s32 256, 256
      %24 = vsyncadd [#allocation3], %s23
      %s25 = sshll.u32 [#allocation2], 4
      %s26 = int_to_ptr.vmem [resolvable:$true] %s25
      %31 = dma.hbm_to_vmem [thread:$0]  %s0, 256, %s26, [#allocation3], 512, 128, 8
    $region5: #{tpu_custom_call.1} parent=1 // pred_fallthru
      _
    // Predicated region
    $region6: #{tpu_custom_call.1} parent=1 // pred_check
      _
    $region7: #{tpu_custom_call.1} parent=1 // pred_check_branch
      %33 = sbr.rel (0) target = $region9
    $region8: #{tpu_custom_call.1} parent=1 // pred_region
      %s34 = sadd.s32 0, 1
      %s36 = ssub.s32 256, 256
      %37 = vsyncadd [#allocation6], %s36
      %s38 = smul.addr %s34, 128
      %s39 = scalar_lea.hbm %s1, %s38
      %s40 = sshll.u32 [#allocation5], 4
      %s41 = int_to_ptr.vmem [resolvable:$true] %s40
      %46 = dma.hbm_to_vmem [thread:$0]  %s39, 256, %s41, [#allocation6], 512, 128, 8
    $region9: #{tpu_custom_call.1} parent=1 // pred_fallthru
      _
    // Predicated region
    $region10: #{tpu_custom_call.1} parent=1 // pred_check
      _
    $region11: #{tpu_custom_call.1} parent=1 // pred_check_branch
      %48 = sbr.rel (0) target = $region13
    $region12: #{tpu_custom_call.1} parent=1 // pred_region
      %s49 = sadd.s32 0, 2
      %s51 = ssub.s32 256, 256
      %52 = vsyncadd [#allocation6], %s51
      %s53 = smul.addr %s49, 128
      %s54 = scalar_lea.hbm %s2, %s53
      %s55 = sshll.u32 [#allocation7], 4
      %s56 = int_to_ptr.vmem [resolvable:$true] %s55
      %61 = dma.hbm_to_vmem [thread:$0]  %s54, 256, %s56, [#allocation6], 512, 128, 8
    $region13: #{tpu_custom_call.1} parent=1 // pred_fallthru
      _
    // Predicated region
    $region14: #{tpu_custom_call.1} parent=1 // pred_check
      _
    $region15: #{tpu_custom_call.1} parent=1 // pred_check_branch
      %63 = sbr.rel (0) target = $region17
    $region16: #{tpu_custom_call.1} parent=1 // pred_region
      %s64 = sadd.s32 0, 3
      %s66 = ssub.s32 256, 256
      %67 = vsyncadd [#allocation9], %s66
      %s68 = smul.addr %s64, 128
      %s69 = scalar_lea.hbm %s3, %s68
      %s70 = sshll.u32 [#allocation8], 4
      %s71 = int_to_ptr.vmem [resolvable:$true] %s70
      %76 = dma.hbm_to_vmem [thread:$0]  %s69, 256, %s71, [#allocation9], 512, 128, 8
    $region17: #{tpu_custom_call.1} parent=1 // pred_fallthru
      _
    // Predicated region
    $region18: #{tpu_custom_call.1} parent=1 // pred_check
      _
    $region19: #{tpu_custom_call.1} parent=1 // pred_check_branch
      %78 = sbr.rel (0) target = $region21
    $region20: #{tpu_custom_call.1} parent=1 // pred_region
      %s80 = ssub.s32 2048, 2048
      %81 = vsyncadd [#allocation9], %s80
      %s82 = sshll.u32 [#allocation10], 4
      %s83 = int_to_ptr.vmem [resolvable:$true] %s82
      %88 = dma.hbm_to_vmem [thread:$0]  %s4, 2048, %s83, [#allocation9], 128, 128, 8
    $region21: #{tpu_custom_call.1} parent=1 // pred_fallthru
      _
    // Predicated region
    $region22: #{tpu_custom_call.1} parent=1 // pred_check
      _
    $region23: #{tpu_custom_call.1} parent=1 // pred_check_branch
      %90 = sbr.rel (0) target = $region25
    $region24: #{tpu_custom_call.1} parent=1 // pred_region
      %s92 = ssub.s32 2048, 2048
      %93 = vsyncadd [#allocation12], %s92
      %s94 = sshll.u32 [#allocation11], 4
      %s95 = int_to_ptr.vmem [resolvable:$true] %s94
      %100 = dma.hbm_to_vmem [thread:$0]  %s5, 2048, %s95, [#allocation12], 128, 128, 8
    $region25: #{tpu_custom_call.1} parent=1 // pred_fallthru
      _
    // Predicated region
    $region26: #{tpu_custom_call.1} parent=1 // pred_check
      _
    $region27: #{tpu_custom_call.1} parent=1 // pred_check_branch
      %102 = sbr.rel (0) target = $region29
    $region28: #{tpu_custom_call.1} parent=1 // pred_region
      %s104 = ssub.s32 2048, 2048
      %105 = vsyncadd [#allocation12], %s104
      %s106 = sshll.u32 [#allocation13], 4
      %s107 = int_to_ptr.vmem [resolvable:$true] %s106
      %112 = dma.hbm_to_vmem [thread:$0]  %s6, 2048, %s107, [#allocation12], 128, 128, 8
    $region29: #{tpu_custom_call.1} parent=1 // pred_fallthru
      _
    // Predicated region
    $region30: #{tpu_custom_call.1} parent=1 // pred_check
      _
    $region31: #{tpu_custom_call.1} parent=1 // pred_check_branch
      %114 = sbr.rel (0) target = $region33
    $region32: #{tpu_custom_call.1} parent=1 // pred_region
      %s116 = ssub.s32 2048, 2048
      %117 = vsyncadd [#allocation15], %s116
      %s118 = sshll.u32 [#allocation14], 4
      %s119 = int_to_ptr.vmem [resolvable:$true] %s118
      %124 = dma.hbm_to_vmem [thread:$0]  %s7, 2048, %s119, [#allocation15], 128, 128, 8
    $region33: #{tpu_custom_call.1} parent=1 // pred_fallthru
      _
    // Predicated region
    $region34: #{tpu_custom_call.1} parent=1 // pred_check
      _
    $region35: #{tpu_custom_call.1} parent=1 // pred_check_branch
      %126 = sbr.rel (0) target = $region37
    $region36: #{tpu_custom_call.1} parent=1 // pred_region
      _
    $region37: #{tpu_custom_call.1} parent=1 // pred_fallthru
      _
    // Predicated region
    $region38: #{tpu_custom_call.1} parent=1 // pred_check
      _
    $region39: #{tpu_custom_call.1} parent=1 // pred_check_branch
      %128 = sbr.rel (0) target = $region41
    $region40: #{tpu_custom_call.1} parent=1 // pred_region
      %129 = dma.done [#allocation3], 256
    $region41: #{tpu_custom_call.1} parent=1 // pred_fallthru
      _
    // Predicated region
    $region42: #{tpu_custom_call.1} parent=1 // pred_check
      _
    $region43: #{tpu_custom_call.1} parent=1 // pred_check_branch
      %131 = sbr.rel (0) target = $region45
    $region44: #{tpu_custom_call.1} parent=1 // pred_region
      %132 = dma.done [#allocation6], 256
    $region45: #{tpu_custom_call.1} parent=1 // pred_fallthru
      _
    // Predicated region
    $region46: #{tpu_custom_call.1} parent=1 // pred_check
      _
    $region47: #{tpu_custom_call.1} parent=1 // pred_check_branch
      %134 = sbr.rel (0) target = $region49
    $region48: #{tpu_custom_call.1} parent=1 // pred_region
      %135 = dma.done [#allocation6], 256
    $region49: #{tpu_custom_call.1} parent=1 // pred_fallthru
      _
    // Predicated region
    $region50: #{tpu_custom_call.1} parent=1 // pred_check
      _
    $region51: #{tpu_custom_call.1} parent=1 // pred_check_branch
      %137 = sbr.rel (0) target = $region53
    $region52: #{tpu_custom_call.1} parent=1 // pred_region
      %138 = dma.done [#allocation9], 256
    $region53: #{tpu_custom_call.1} parent=1 // pred_fallthru
      _
    // Predicated region
    $region54: #{tpu_custom_call.1} parent=1 // pred_check
      _
    $region55: #{tpu_custom_call.1} parent=1 // pred_check_branch
      %140 = sbr.rel (0) target = $region57
    $region56: #{tpu_custom_call.1} parent=1 // pred_region
      %141 = dma.done [#allocation9], 2048
    $region57: #{tpu_custom_call.1} parent=1 // pred_fallthru
      _
    // Predicated region
    $region58: #{tpu_custom_call.1} parent=1 // pred_check
      _
    $region59: #{tpu_custom_call.1} parent=1 // pred_check_branch
      %143 = sbr.rel (0) target = $region61
    $region60: #{tpu_custom_call.1} parent=1 // pred_region
      %144 = dma.done [#allocation12], 2048
    $region61: #{tpu_custom_call.1} parent=1 // pred_fallthru
      _
    // Predicated region
    $region62: #{tpu_custom_call.1} parent=1 // pred_check
      _
    $region63: #{tpu_custom_call.1} parent=1 // pred_check_branch
      %146 = sbr.rel (0) target = $region65
    $region64: #{tpu_custom_call.1} parent=1 // pred_region
      %147 = dma.done [#allocation12], 2048
    $region65: #{tpu_custom_call.1} parent=1 // pred_fallthru
      _
    // Predicated region
    $region66: #{tpu_custom_call.1} parent=1 // pred_check
      _
    $region67: #{tpu_custom_call.1} parent=1 // pred_check_branch
      %149 = sbr.rel (0) target = $region69
    $region68: #{tpu_custom_call.1} parent=1 // pred_region
      %150 = dma.done [#allocation15], 2048
    $region69: #{tpu_custom_call.1} parent=1 // pred_fallthru
      _
    %s151 = sadd.s32 0, 1
    %s152 = sadd.s32 0, 2
    %s153 = sadd.s32 0, 3
    %p154 = scmp.eq.s32.totalorder 0, 0
    // Predicated region
    $region70: #{tpu_custom_call.1} parent=1 // pred_check
      %p155 = pneg %p154
    $region71: #{tpu_custom_call.1} parent=1 // pred_check_branch
      %157 = sbr.rel (%p155) target = $region73
    $region72: #{tpu_custom_call.1} parent=1 // pred_region
      %v158 = vld [vmem:[%s8] sm:$0xf]
      %v160 = vlaneseq
      %v161 = vshrl.u32 %v160, 7
      %v162 = vsub.s32 0, %v161
      %v163 = vrot.slane %v158, %v162
      %v164 = vlaneseq
      %v165 = vshrl.u32 %v164, 7
      %v166 = vsub.s32 1, %v165
      %v167 = vrot.slane %v158, %v166
      %v168 = vlaneseq
      %v169 = vshrl.u32 %v168, 7
      %v170 = vsub.s32 2, %v169
      %v171 = vrot.slane %v158, %v170
      %v172 = vlaneseq
      %v173 = vshrl.u32 %v172, 7
      %v174 = vsub.s32 3, %v173
      %v175 = vrot.slane %v158, %v174
      %180 = vst [vmem:[#allocation16] sm:$0xff] %v163
      %181 = vst [vmem:[#allocation16 + $0x8] sm:$0xff] %v167
      %182 = vst [vmem:[#allocation16 + $0x10] sm:$0xff] %v171
      %183 = vst [vmem:[#allocation16 + $0x18] sm:$0xff] %v175
      %184 = vst [vmem:[#allocation16 + $0x20] sm:$0xff] %v163
      %185 = vst [vmem:[#allocation16 + $0x28] sm:$0xff] %v167
      %186 = vst [vmem:[#allocation16 + $0x30] sm:$0xff] %v171
      %187 = vst [vmem:[#allocation16 + $0x38] sm:$0xff] %v175
    $region73: #{tpu_custom_call.1} parent=1 // pred_fallthru
      _
    %v188 = vld [vmem:[#allocation2] sm:$0xff]
    %v189 = vld [vmem:[#allocation2 + $0x8] sm:$0xff]
    %v190 = vld [vmem:[#allocation5] sm:$0xff]
    %v191 = vld [vmem:[#allocation5 + $0x8] sm:$0xff]
    %v192 = vld [vmem:[#allocation7] sm:$0xff]
    %v193 = vld [vmem:[#allocation7 + $0x8] sm:$0xff]
    %v194 = vld [vmem:[#allocation8] sm:$0xff]
    %v195 = vld [vmem:[#allocation8 + $0x8] sm:$0xff]
    %v196 = vld [vmem:[#allocation10] sm:$0xff]
    %v197 = vld [vmem:[#allocation10 + $0x8] sm:$0xff]
    %v198 = vld [vmem:[#allocation10 + $0x10] sm:$0xff]
    %v199 = vld [vmem:[#allocation10 + $0x18] sm:$0xff]
    %v200 = vld [vmem:[#allocation10 + $0x20] sm:$0xff]
    %v201 = vld [vmem:[#allocation10 + $0x28] sm:$0xff]
    %v202 = vld [vmem:[#allocation10 + $0x30] sm:$0xff]
    %v203 = vld [vmem:[#allocation10 + $0x38] sm:$0xff]
    %v204 = vld [vmem:[#allocation10 + $0x40] sm:$0xff]
    %v205 = vld [vmem:[#allocation10 + $0x48] sm:$0xff]
    %v206 = vld [vmem:[#allocation10 + $0x50] sm:$0xff]
    %v207 = vld [vmem:[#allocation10 + $0x58] sm:$0xff]
    %v208 = vld [vmem:[#allocation10 + $0x60] sm:$0xff]
    %v209 = vld [vmem:[#allocation10 + $0x68] sm:$0xff]
    %v210 = vld [vmem:[#allocation10 + $0x70] sm:$0xff]
    %v211 = vld [vmem:[#allocation10 + $0x78] sm:$0xff]
    %v212 = vld [vmem:[#allocation11] sm:$0xff]
    %v213 = vld [vmem:[#allocation11 + $0x8] sm:$0xff]
    %v214 = vld [vmem:[#allocation11 + $0x10] sm:$0xff]
    %v215 = vld [vmem:[#allocation11 + $0x18] sm:$0xff]
    %v216 = vld [vmem:[#allocation11 + $0x20] sm:$0xff]
    %v217 = vld [vmem:[#allocation11 + $0x28] sm:$0xff]
    %v218 = vld [vmem:[#allocation11 + $0x30] sm:$0xff]
    %v219 = vld [vmem:[#allocation11 + $0x38] sm:$0xff]
    %v220 = vld [vmem:[#allocation11 + $0x40] sm:$0xff]
    %v221 = vld [vmem:[#allocation11 + $0x48] sm:$0xff]
    %v222 = vld [vmem:[#allocation11 + $0x50] sm:$0xff]
    %v223 = vld [vmem:[#allocation11 + $0x58] sm:$0xff]
    %v224 = vld [vmem:[#allocation11 + $0x60] sm:$0xff]
    %v225 = vld [vmem:[#allocation11 + $0x68] sm:$0xff]
    %v226 = vld [vmem:[#allocation11 + $0x70] sm:$0xff]
    %v227 = vld [vmem:[#allocation11 + $0x78] sm:$0xff]
    %v228 = vld [vmem:[#allocation13] sm:$0xff]
    %v229 = vld [vmem:[#allocation13 + $0x8] sm:$0xff]
    %v230 = vld [vmem:[#allocation13 + $0x10] sm:$0xff]
    %v231 = vld [vmem:[#allocation13 + $0x18] sm:$0xff]
    %v232 = vld [vmem:[#allocation13 + $0x20] sm:$0xff]
    %v233 = vld [vmem:[#allocation13 + $0x28] sm:$0xff]
    %v234 = vld [vmem:[#allocation13 + $0x30] sm:$0xff]
    %v235 = vld [vmem:[#allocation13 + $0x38] sm:$0xff]
    %v236 = vld [vmem:[#allocation13 + $0x40] sm:$0xff]
    %v237 = vld [vmem:[#allocation13 + $0x48] sm:$0xff]
    %v238 = vld [vmem:[#allocation13 + $0x50] sm:$0xff]
    %v239 = vld [vmem:[#allocation13 + $0x58] sm:$0xff]
    %v240 = vld [vmem:[#allocation13 + $0x60] sm:$0xff]
    %v241 = vld [vmem:[#allocation13 + $0x68] sm:$0xff]
    %v242 = vld [vmem:[#allocation13 + $0x70] sm:$0xff]
    %v243 = vld [vmem:[#allocation13 + $0x78] sm:$0xff]
    %v244 = vld [vmem:[#allocation14] sm:$0xff]
    %v245 = vld [vmem:[#allocation14 + $0x8] sm:$0xff]
    %v246 = vld [vmem:[#allocation14 + $0x10] sm:$0xff]
    %v247 = vld [vmem:[#allocation14 + $0x18] sm:$0xff]
    %v248 = vld [vmem:[#allocation14 + $0x20] sm:$0xff]
    %v249 = vld [vmem:[#allocation14 + $0x28] sm:$0xff]
    %v250 = vld [vmem:[#allocation14 + $0x30] sm:$0xff]
    %v251 = vld [vmem:[#allocation14 + $0x38] sm:$0xff]
    %v252 = vld [vmem:[#allocation14 + $0x40] sm:$0xff]
    %v253 = vld [vmem:[#allocation14 + $0x48] sm:$0xff]
    %v254 = vld [vmem:[#allocation14 + $0x50] sm:$0xff]
    %v255 = vld [vmem:[#allocation14 + $0x58] sm:$0xff]
    %v256 = vld [vmem:[#allocation14 + $0x60] sm:$0xff]
    %v257 = vld [vmem:[#allocation14 + $0x68] sm:$0xff]
    %v258 = vld [vmem:[#allocation14 + $0x70] sm:$0xff]
    %v259 = vld [vmem:[#allocation14 + $0x78] sm:$0xff]
    %v260 = vld [vmem:[#allocation16] sm:$0xff]
    %v261 = vld [vmem:[#allocation16 + $0x20] sm:$0xff]
    %262 = vmatprep.subr.mxu0 0.0
    %263 = vmatpush1.msra.mxu0 %v196
    %264 = vmatprep.subr.mxu0 0.0
    %265 = vmatpush1.msra.mxu0 %v197
    %266 = vmatprep.subr.mxu0 0.0
    %267 = vmatpush1.msra.mxu0 %v198
    %268 = vmatprep.subr.mxu0 0.0
    %269 = vmatpush1.msra.mxu0 %v199
    %270 = vmatprep.subr.mxu0 0.0
    %271 = vmatpush1.msra.mxu0 %v200
    %272 = vmatprep.subr.mxu0 0.0
    %273 = vmatpush1.msra.mxu0 %v201
    %274 = vmatprep.subr.mxu0 0.0
    %275 = vmatpush1.msra.mxu0 %v202
    %276 = vmatprep.subr.mxu0 0.0
    %277 = vmatpush1.msra.mxu0 %v203
    %278 = vmatprep.subr.mxu0 0.0
    %279 = vmatpush1.msra.mxu0 %v204
    %280 = vmatprep.subr.mxu0 0.0
    %281 = vmatpush1.msra.mxu0 %v205
    %282 = vmatprep.subr.mxu0 0.0
    %283 = vmatpush1.msra.mxu0 %v206
    %284 = vmatprep.subr.mxu0 0.0
    %285 = vmatpush1.msra.mxu0 %v207
    %286 = vmatprep.subr.mxu0 0.0
    %287 = vmatpush1.msra.mxu0 %v208
    %288 = vmatprep.subr.mxu0 0.0
    %289 = vmatpush1.msra.mxu0 %v209
    %290 = vmatprep.subr.mxu0 0.0
    %291 = vmatpush1.msra.mxu0 %v210
    %292 = vmatprep.subr.mxu0 0.0
    %293 = vmatpush1.msra.mxu0 %v211
    %294 = vmatprep.subr.mxu0 0.0
    %295 = vmatpush1.msra.mxu0 0.0
    %296 = vmatprep.subr.mxu0 0.0
    %297 = vmatpush1.msra.mxu0 0.0
    %298 = vmatprep.subr.mxu0 0.0
    %299 = vmatpush1.msra.mxu0 0.0
    %300 = vmatprep.subr.mxu0 0.0
    %301 = vmatpush1.msra.mxu0 0.0
    %302 = vmatprep.subr.mxu0 0.0
    %303 = vmatpush1.msra.mxu0 0.0
    %304 = vmatprep.subr.mxu0 0.0
    %305 = vmatpush1.msra.mxu0 0.0
    %306 = vmatprep.subr.mxu0 0.0
    %307 = vmatpush1.msra.mxu0 0.0
    %308 = vmatprep.subr.mxu0 0.0
    %309 = vmatpush1.msra.mxu0 0.0
    %310 = vmatprep.subr.mxu0 0.0
    %311 = vmatpush1.msra.mxu0 0.0
    %312 = vmatprep.subr.mxu0 0.0
    %313 = vmatpush1.msra.mxu0 0.0
    %314 = vmatprep.subr.mxu0 0.0
    %315 = vmatpush1.msra.mxu0 0.0
    %316 = vmatprep.subr.mxu0 0.0
    %317 = vmatpush1.msra.mxu0 0.0
    %318 = vmatprep.subr.mxu0 0.0
    %319 = vmatpush1.msra.mxu0 0.0
    %320 = vmatprep.subr.mxu0 0.0
    %321 = vmatpush1.msra.mxu0 0.0
    %322 = vmatprep.subr.mxu0 0.0
    %323 = vmatpush1.msra.mxu0 0.0
    %324 = vmatprep.subr.mxu0 0.0
    %325 = vmatpush1.msra.mxu0 0.0
    %326 = vmatprep.mubr.f32.mxu0 0.0
    %327 = vmatmul.mubr.f32.gmra.mrb[0].mxu0 %v188
    %v328 = vpop.f32.mrb[0].mxu0
    %v329 = vadd.f32 0.0, %v328
    %v330 = vpop.f32.mrb[0].mxu0
    %331 = vmatprep.mubr.f32.mxu0 0.0
    %332 = vmatmul.mubr.f32.gmra.mrb[0].mxu0 %v189
    %v333 = vpop.f32.mrb[0].mxu0
    %v334 = vadd.f32 0.0, %v333
    %v335 = vpop.f32.mrb[0].mxu0
    %336 = vdwg.mxu0
    %337 = vmatprep.subr.mxu0 0.0
    %338 = vmatpush1.msra.mxu0 %v212
    %339 = vmatprep.subr.mxu0 0.0
    %340 = vmatpush1.msra.mxu0 %v213
    %341 = vmatprep.subr.mxu0 0.0
    %342 = vmatpush1.msra.mxu0 %v214
    %343 = vmatprep.subr.mxu0 0.0
    %344 = vmatpush1.msra.mxu0 %v215
    %345 = vmatprep.subr.mxu0 0.0
    %346 = vmatpush1.msra.mxu0 %v216
    %347 = vmatprep.subr.mxu0 0.0
    %348 = vmatpush1.msra.mxu0 %v217
    %349 = vmatprep.subr.mxu0 0.0
    %350 = vmatpush1.msra.mxu0 %v218
    %351 = vmatprep.subr.mxu0 0.0
    %352 = vmatpush1.msra.mxu0 %v219
    %353 = vmatprep.subr.mxu0 0.0
    %354 = vmatpush1.msra.mxu0 %v220
    %355 = vmatprep.subr.mxu0 0.0
    %356 = vmatpush1.msra.mxu0 %v221
    %357 = vmatprep.subr.mxu0 0.0
    %358 = vmatpush1.msra.mxu0 %v222
    %359 = vmatprep.subr.mxu0 0.0
    %360 = vmatpush1.msra.mxu0 %v223
    %361 = vmatprep.subr.mxu0 0.0
    %362 = vmatpush1.msra.mxu0 %v224
    %363 = vmatprep.subr.mxu0 0.0
    %364 = vmatpush1.msra.mxu0 %v225
    %365 = vmatprep.subr.mxu0 0.0
    %366 = vmatpush1.msra.mxu0 %v226
    %367 = vmatprep.subr.mxu0 0.0
    %368 = vmatpush1.msra.mxu0 %v227
    %369 = vmatprep.subr.mxu0 0.0
    %370 = vmatpush1.msra.mxu0 0.0
    %371 = vmatprep.subr.mxu0 0.0
    %372 = vmatpush1.msra.mxu0 0.0
    %373 = vmatprep.subr.mxu0 0.0
    %374 = vmatpush1.msra.mxu0 0.0
    %375 = vmatprep.subr.mxu0 0.0
    %376 = vmatpush1.msra.mxu0 0.0
    %377 = vmatprep.subr.mxu0 0.0
    %378 = vmatpush1.msra.mxu0 0.0
    %379 = vmatprep.subr.mxu0 0.0
    %380 = vmatpush1.msra.mxu0 0.0
    %381 = vmatprep.subr.mxu0 0.0
    %382 = vmatpush1.msra.mxu0 0.0
    %383 = vmatprep.subr.mxu0 0.0
    %384 = vmatpush1.msra.mxu0 0.0
    %385 = vmatprep.subr.mxu0 0.0
    %386 = vmatpush1.msra.mxu0 0.0
    %387 = vmatprep.subr.mxu0 0.0
    %388 = vmatpush1.msra.mxu0 0.0
    %389 = vmatprep.subr.mxu0 0.0
    %390 = vmatpush1.msra.mxu0 0.0
    %391 = vmatprep.subr.mxu0 0.0
    %392 = vmatpush1.msra.mxu0 0.0
    %393 = vmatprep.subr.mxu0 0.0
    %394 = vmatpush1.msra.mxu0 0.0
    %395 = vmatprep.subr.mxu0 0.0
    %396 = vmatpush1.msra.mxu0 0.0
    %397 = vmatprep.subr.mxu0 0.0
    %398 = vmatpush1.msra.mxu0 0.0
    %399 = vmatprep.subr.mxu0 0.0
    %400 = vmatpush1.msra.mxu0 0.0
    %401 = vmatprep.mubr.f32.mxu0 0.0
    %402 = vmatmul.mubr.f32.gmra.mrb[0].mxu0 %v190
    %v403 = vpop.f32.mrb[0].mxu0
    %v404 = vadd.f32 0.0, %v403
    %v405 = vpop.f32.mrb[0].mxu0
    %406 = vmatprep.mubr.f32.mxu0 0.0
    %407 = vmatmul.mubr.f32.gmra.mrb[0].mxu0 %v191
    %v408 = vpop.f32.mrb[0].mxu0
    %v409 = vadd.f32 0.0, %v408
    %v410 = vpop.f32.mrb[0].mxu0
    %411 = vdwg.mxu0
    %v412 = vsub.f32 %v329, %v404
    %v413 = vsub.f32 %v334, %v409
    %414 = vmatprep.subr.mxu0 0.0
    %415 = vmatpush1.msra.mxu0 %v228
    %416 = vmatprep.subr.mxu0 0.0
    %417 = vmatpush1.msra.mxu0 %v229
    %418 = vmatprep.subr.mxu0 0.0
    %419 = vmatpush1.msra.mxu0 %v230
    %420 = vmatprep.subr.mxu0 0.0
    %421 = vmatpush1.msra.mxu0 %v231
    %422 = vmatprep.subr.mxu0 0.0
    %423 = vmatpush1.msra.mxu0 %v232
    %424 = vmatprep.subr.mxu0 0.0
    %425 = vmatpush1.msra.mxu0 %v233
    %426 = vmatprep.subr.mxu0 0.0
    %427 = vmatpush1.msra.mxu0 %v234
    %428 = vmatprep.subr.mxu0 0.0
    %429 = vmatpush1.msra.mxu0 %v235
    %430 = vmatprep.subr.mxu0 0.0
    %431 = vmatpush1.msra.mxu0 %v236
    %432 = vmatprep.subr.mxu0 0.0
    %433 = vmatpush1.msra.mxu0 %v237
    %434 = vmatprep.subr.mxu0 0.0
    %435 = vmatpush1.msra.mxu0 %v238
    %436 = vmatprep.subr.mxu0 0.0
    %437 = vmatpush1.msra.mxu0 %v239
    %438 = vmatprep.subr.mxu0 0.0
    %439 = vmatpush1.msra.mxu0 %v240
    %440 = vmatprep.subr.mxu0 0.0
    %441 = vmatpush1.msra.mxu0 %v241
    %442 = vmatprep.subr.mxu0 0.0
    %443 = vmatpush1.msra.mxu0 %v242
    %444 = vmatprep.subr.mxu0 0.0
    %445 = vmatpush1.msra.mxu0 %v243
    %446 = vmatprep.subr.mxu0 0.0
    %447 = vmatpush1.msra.mxu0 0.0
    %448 = vmatprep.subr.mxu0 0.0
    %449 = vmatpush1.msra.mxu0 0.0
    %450 = vmatprep.subr.mxu0 0.0
    %451 = vmatpush1.msra.mxu0 0.0
    %452 = vmatprep.subr.mxu0 0.0
    %453 = vmatpush1.msra.mxu0 0.0
    %454 = vmatprep.subr.mxu0 0.0
    %455 = vmatpush1.msra.mxu0 0.0
    %456 = vmatprep.subr.mxu0 0.0
    %457 = vmatpush1.msra.mxu0 0.0
    %458 = vmatprep.subr.mxu0 0.0
    %459 = vmatpush1.msra.mxu0 0.0
    %460 = vmatprep.subr.mxu0 0.0
    %461 = vmatpush1.msra.mxu0 0.0
    %462 = vmatprep.subr.mxu0 0.0
    %463 = vmatpush1.msra.mxu0 0.0
    %464 = vmatprep.subr.mxu0 0.0
    %465 = vmatpush1.msra.mxu0 0.0
    %466 = vmatprep.subr.mxu0 0.0
    %467 = vmatpush1.msra.mxu0 0.0
    %468 = vmatprep.subr.mxu0 0.0
    %469 = vmatpush1.msra.mxu0 0.0
    %470 = vmatprep.subr.mxu0 0.0
    %471 = vmatpush1.msra.mxu0 0.0
    %472 = vmatprep.subr.mxu0 0.0
    %473 = vmatpush1.msra.mxu0 0.0
    %474 = vmatprep.subr.mxu0 0.0
    %475 = vmatpush1.msra.mxu0 0.0
    %476 = vmatprep.subr.mxu0 0.0
    %477 = vmatpush1.msra.mxu0 0.0
    %478 = vmatprep.mubr.f32.mxu0 0.0
    %479 = vmatmul.mubr.f32.gmra.mrb[0].mxu0 %v192
    %v480 = vpop.f32.mrb[0].mxu0
    %v481 = vadd.f32 0.0, %v480
    %v482 = vpop.f32.mrb[0].mxu0
    %483 = vmatprep.mubr.f32.mxu0 0.0
    %484 = vmatmul.mubr.f32.gmra.mrb[0].mxu0 %v193
    %v485 = vpop.f32.mrb[0].mxu0
    %v486 = vadd.f32 0.0, %v485
    %v487 = vpop.f32.mrb[0].mxu0
    %488 = vdwg.mxu0
    %v489 = vsub.f32 %v412, %v481
    %v490 = vsub.f32 %v413, %v486
    %491 = vmatprep.subr.mxu0 0.0
    %492 = vmatpush1.msra.mxu0 %v244
    %493 = vmatprep.subr.mxu0 0.0
    %494 = vmatpush1.msra.mxu0 %v245
    %495 = vmatprep.subr.mxu0 0.0
    %496 = vmatpush1.msra.mxu0 %v246
    %497 = vmatprep.subr.mxu0 0.0
    %498 = vmatpush1.msra.mxu0 %v247
    %499 = vmatprep.subr.mxu0 0.0
    %500 = vmatpush1.msra.mxu0 %v248
    %501 = vmatprep.subr.mxu0 0.0
    %502 = vmatpush1.msra.mxu0 %v249
    %503 = vmatprep.subr.mxu0 0.0
    %504 = vmatpush1.msra.mxu0 %v250
    %505 = vmatprep.subr.mxu0 0.0
    %506 = vmatpush1.msra.mxu0 %v251
    %507 = vmatprep.subr.mxu0 0.0
    %508 = vmatpush1.msra.mxu0 %v252
    %509 = vmatprep.subr.mxu0 0.0
    %510 = vmatpush1.msra.mxu0 %v253
    %511 = vmatprep.subr.mxu0 0.0
    %512 = vmatpush1.msra.mxu0 %v254
    %513 = vmatprep.subr.mxu0 0.0
    %514 = vmatpush1.msra.mxu0 %v255
    %515 = vmatprep.subr.mxu0 0.0
    %516 = vmatpush1.msra.mxu0 %v256
    %517 = vmatprep.subr.mxu0 0.0
    %518 = vmatpush1.msra.mxu0 %v257
    %519 = vmatprep.subr.mxu0 0.0
    %520 = vmatpush1.msra.mxu0 %v258
    %521 = vmatprep.subr.mxu0 0.0
    %522 = vmatpush1.msra.mxu0 %v259
    %523 = vmatprep.subr.mxu0 0.0
    %524 = vmatpush1.msra.mxu0 0.0
    %525 = vmatprep.subr.mxu0 0.0
    %526 = vmatpush1.msra.mxu0 0.0
    %527 = vmatprep.subr.mxu0 0.0
    %528 = vmatpush1.msra.mxu0 0.0
    %529 = vmatprep.subr.mxu0 0.0
    %530 = vmatpush1.msra.mxu0 0.0
    %531 = vmatprep.subr.mxu0 0.0
    %532 = vmatpush1.msra.mxu0 0.0
    %533 = vmatprep.subr.mxu0 0.0
    %534 = vmatpush1.msra.mxu0 0.0
    %535 = vmatprep.subr.mxu0 0.0
    %536 = vmatpush1.msra.mxu0 0.0
    %537 = vmatprep.subr.mxu0 0.0
    %538 = vmatpush1.msra.mxu0 0.0
    %539 = vmatprep.subr.mxu0 0.0
    %540 = vmatpush1.msra.mxu0 0.0
    %541 = vmatprep.subr.mxu0 0.0
    %542 = vmatpush1.msra.mxu0 0.0
    %543 = vmatprep.subr.mxu0 0.0
    %544 = vmatpush1.msra.mxu0 0.0
    %545 = vmatprep.subr.mxu0 0.0
    %546 = vmatpush1.msra.mxu0 0.0
    %547 = vmatprep.subr.mxu0 0.0
    %548 = vmatpush1.msra.mxu0 0.0
    %549 = vmatprep.subr.mxu0 0.0
    %550 = vmatpush1.msra.mxu0 0.0
    %551 = vmatprep.subr.mxu0 0.0
    %552 = vmatpush1.msra.mxu0 0.0
    %553 = vmatprep.subr.mxu0 0.0
    %554 = vmatpush1.msra.mxu0 0.0
    %555 = vmatprep.mubr.f32.mxu0 0.0
    %556 = vmatmul.mubr.f32.gmra.mrb[0].mxu0 %v194
    %v557 = vpop.f32.mrb[0].mxu0
    %v558 = vadd.f32 0.0, %v557
    %v559 = vpop.f32.mrb[0].mxu0
    %560 = vmatprep.mubr.f32.mxu0 0.0
    %561 = vmatmul.mubr.f32.gmra.mrb[0].mxu0 %v195
    %v562 = vpop.f32.mrb[0].mxu0
    %v563 = vadd.f32 0.0, %v562
    %v564 = vpop.f32.mrb[0].mxu0
    %565 = vdwg.mxu0
    %v566 = vsub.f32 %v489, %v558
    %v567 = vsub.f32 %v490, %v563
    %v568 = vadd.f32 %v260, %v566
    %v569 = vadd.f32 %v261, %v567
    %570 = vst [vmem:[#allocation16] sm:$0xff] %v568
    %571 = vst [vmem:[#allocation16 + $0x20] sm:$0xff] %v569
    %v572 = vld [vmem:[#allocation16 + $0x8] sm:$0xff]
    %v573 = vld [vmem:[#allocation16 + $0x28] sm:$0xff]
    %574 = vmatprep.subr.mxu0 0.0
    %575 = vmatpush1.msra.mxu0 %v196
    %576 = vmatprep.subr.mxu0 0.0
    %577 = vmatpush1.msra.mxu0 %v197
    %578 = vmatprep.subr.mxu0 0.0
    %579 = vmatpush1.msra.mxu0 %v198
    %580 = vmatprep.subr.mxu0 0.0
    %581 = vmatpush1.msra.mxu0 %v199
    %582 = vmatprep.subr.mxu0 0.0
    %583 = vmatpush1.msra.mxu0 %v200
    %584 = vmatprep.subr.mxu0 0.0
    %585 = vmatpush1.msra.mxu0 %v201
    %586 = vmatprep.subr.mxu0 0.0
    %587 = vmatpush1.msra.mxu0 %v202
    %588 = vmatprep.subr.mxu0 0.0
    %589 = vmatpush1.msra.mxu0 %v203
    %590 = vmatprep.subr.mxu0 0.0
    %591 = vmatpush1.msra.mxu0 %v204
    %592 = vmatprep.subr.mxu0 0.0
    %593 = vmatpush1.msra.mxu0 %v205
    %594 = vmatprep.subr.mxu0 0.0
    %595 = vmatpush1.msra.mxu0 %v206
    %596 = vmatprep.subr.mxu0 0.0
    %597 = vmatpush1.msra.mxu0 %v207
    %598 = vmatprep.subr.mxu0 0.0
    %599 = vmatpush1.msra.mxu0 %v208
    %600 = vmatprep.subr.mxu0 0.0
    %601 = vmatpush1.msra.mxu0 %v209
    %602 = vmatprep.subr.mxu0 0.0
    %603 = vmatpush1.msra.mxu0 %v210
    %604 = vmatprep.subr.mxu0 0.0
    %605 = vmatpush1.msra.mxu0 %v211
    %606 = vmatprep.subr.mxu0 0.0
    %607 = vmatpush1.msra.mxu0 0.0
    %608 = vmatprep.subr.mxu0 0.0
    %609 = vmatpush1.msra.mxu0 0.0
    %610 = vmatprep.subr.mxu0 0.0
    %611 = vmatpush1.msra.mxu0 0.0
    %612 = vmatprep.subr.mxu0 0.0
    %613 = vmatpush1.msra.mxu0 0.0
    %614 = vmatprep.subr.mxu0 0.0
    %615 = vmatpush1.msra.mxu0 0.0
    %616 = vmatprep.subr.mxu0 0.0
    %617 = vmatpush1.msra.mxu0 0.0
    %618 = vmatprep.subr.mxu0 0.0
    %619 = vmatpush1.msra.mxu0 0.0
    %620 = vmatprep.subr.mxu0 0.0
    %621 = vmatpush1.msra.mxu0 0.0
    %622 = vmatprep.subr.mxu0 0.0
    %623 = vmatpush1.msra.mxu0 0.0
    %624 = vmatprep.subr.mxu0 0.0
    %625 = vmatpush1.msra.mxu0 0.0
    %626 = vmatprep.subr.mxu0 0.0
    %627 = vmatpush1.msra.mxu0 0.0
    %628 = vmatprep.subr.mxu0 0.0
    %629 = vmatpush1.msra.mxu0 0.0
    %630 = vmatprep.subr.mxu0 0.0
    %631 = vmatpush1.msra.mxu0 0.0
    %632 = vmatprep.subr.mxu0 0.0
    %633 = vmatpush1.msra.mxu0 0.0
    %634 = vmatprep.subr.mxu0 0.0
    %635 = vmatpush1.msra.mxu0 0.0
    %636 = vmatprep.subr.mxu0 0.0
    %637 = vmatpush1.msra.mxu0 0.0
    %638 = vmatprep.mubr.f32.mxu0 0.0
    %639 = vmatmul.mubr.f32.gmra.mrb[0].mxu0 %v190
    %v640 = vpop.f32.mrb[0].mxu0
    %v641 = vadd.f32 0.0, %v640
    %v642 = vpop.f32.mrb[0].mxu0
    %643 = vmatprep.mubr.f32.mxu0 0.0
    %644 = vmatmul.mubr.f32.gmra.mrb[0].mxu0 %v191
    %v645 = vpop.f32.mrb[0].mxu0
    %v646 = vadd.f32 0.0, %v645
    %v647 = vpop.f32.mrb[0].mxu0
    %648 = vdwg.mxu0
    %649 = vmatprep.subr.mxu0 0.0
    %650 = vmatpush1.msra.mxu0 %v212
    %651 = vmatprep.subr.mxu0 0.0
    %652 = vmatpush1.msra.mxu0 %v213
    %653 = vmatprep.subr.mxu0 0.0
    %654 = vmatpush1.msra.mxu0 %v214
    %655 = vmatprep.subr.mxu0 0.0
    %656 = vmatpush1.msra.mxu0 %v215
    %657 = vmatprep.subr.mxu0 0.0
    %658 = vmatpush1.msra.mxu0 %v216
    %659 = vmatprep.subr.mxu0 0.0
    %660 = vmatpush1.msra.mxu0 %v217
    %661 = vmatprep.subr.mxu0 0.0
    %662 = vmatpush1.msra.mxu0 %v218
    %663 = vmatprep.subr.mxu0 0.0
    %664 = vmatpush1.msra.mxu0 %v219
    %665 = vmatprep.subr.mxu0 0.0
    %666 = vmatpush1.msra.mxu0 %v220
    %667 = vmatprep.subr.mxu0 0.0
    %668 = vmatpush1.msra.mxu0 %v221
    %669 = vmatprep.subr.mxu0 0.0
    %670 = vmatpush1.msra.mxu0 %v222
    %671 = vmatprep.subr.mxu0 0.0
    %672 = vmatpush1.msra.mxu0 %v223
    %673 = vmatprep.subr.mxu0 0.0
    %674 = vmatpush1.msra.mxu0 %v224
    %675 = vmatprep.subr.mxu0 0.0
    %676 = vmatpush1.msra.mxu0 %v225
    %677 = vmatprep.subr.mxu0 0.0
    %678 = vmatpush1.msra.mxu0 %v226
    %679 = vmatprep.subr.mxu0 0.0
    %680 = vmatpush1.msra.mxu0 %v227
    %681 = vmatprep.subr.mxu0 0.0
    %682 = vmatpush1.msra.mxu0 0.0
    %683 = vmatprep.subr.mxu0 0.0
    %684 = vmatpush1.msra.mxu0 0.0
    %685 = vmatprep.subr.mxu0 0.0
    %686 = vmatpush1.msra.mxu0 0.0
    %687 = vmatprep.subr.mxu0 0.0
    %688 = vmatpush1.msra.mxu0 0.0
    %689 = vmatprep.subr.mxu0 0.0
    %690 = vmatpush1.msra.mxu0 0.0
    %691 = vmatprep.subr.mxu0 0.0
    %692 = vmatpush1.msra.mxu0 0.0
    %693 = vmatprep.subr.mxu0 0.0
    %694 = vmatpush1.msra.mxu0 0.0
    %695 = vmatprep.subr.mxu0 0.0
    %696 = vmatpush1.msra.mxu0 0.0
    %697 = vmatprep.subr.mxu0 0.0
    %698 = vmatpush1.msra.mxu0 0.0
    %699 = vmatprep.subr.mxu0 0.0
    %700 = vmatpush1.msra.mxu0 0.0
    %701 = vmatprep.subr.mxu0 0.0
    %702 = vmatpush1.msra.mxu0 0.0
    %703 = vmatprep.subr.mxu0 0.0
    %704 = vmatpush1.msra.mxu0 0.0
    %705 = vmatprep.subr.mxu0 0.0
    %706 = vmatpush1.msra.mxu0 0.0
    %707 = vmatprep.subr.mxu0 0.0
    %708 = vmatpush1.msra.mxu0 0.0
    %709 = vmatprep.subr.mxu0 0.0
    %710 = vmatpush1.msra.mxu0 0.0
    %711 = vmatprep.subr.mxu0 0.0
    %712 = vmatpush1.msra.mxu0 0.0
    %713 = vmatprep.mubr.f32.mxu0 0.0
    %714 = vmatmul.mubr.f32.gmra.mrb[0].mxu0 %v188
    %v715 = vpop.f32.mrb[0].mxu0
    %v716 = vadd.f32 %v641, %v715
    %v717 = vpop.f32.mrb[0].mxu0
    %718 = vmatprep.mubr.f32.mxu0 0.0
    %719 = vmatmul.mubr.f32.gmra.mrb[0].mxu0 %v189
    %v720 = vpop.f32.mrb[0].mxu0
    %v721 = vadd.f32 %v646, %v720
    %v722 = vpop.f32.mrb[0].mxu0
    %723 = vdwg.mxu0
    %724 = vmatprep.subr.mxu0 0.0
    %725 = vmatpush1.msra.mxu0 %v244
    %726 = vmatprep.subr.mxu0 0.0
    %727 = vmatpush1.msra.mxu0 %v245
    %728 = vmatprep.subr.mxu0 0.0
    %729 = vmatpush1.msra.mxu0 %v246
    %730 = vmatprep.subr.mxu0 0.0
    %731 = vmatpush1.msra.mxu0 %v247
    %732 = vmatprep.subr.mxu0 0.0
    %733 = vmatpush1.msra.mxu0 %v248
    %734 = vmatprep.subr.mxu0 0.0
    %735 = vmatpush1.msra.mxu0 %v249
    %736 = vmatprep.subr.mxu0 0.0
    %737 = vmatpush1.msra.mxu0 %v250
    %738 = vmatprep.subr.mxu0 0.0
    %739 = vmatpush1.msra.mxu0 %v251
    %740 = vmatprep.subr.mxu0 0.0
    %741 = vmatpush1.msra.mxu0 %v252
    %742 = vmatprep.subr.mxu0 0.0
    %743 = vmatpush1.msra.mxu0 %v253
    %744 = vmatprep.subr.mxu0 0.0
    %745 = vmatpush1.msra.mxu0 %v254
    %746 = vmatprep.subr.mxu0 0.0
    %747 = vmatpush1.msra.mxu0 %v255
    %748 = vmatprep.subr.mxu0 0.0
    %749 = vmatpush1.msra.mxu0 %v256
    %750 = vmatprep.subr.mxu0 0.0
    %751 = vmatpush1.msra.mxu0 %v257
    %752 = vmatprep.subr.mxu0 0.0
    %753 = vmatpush1.msra.mxu0 %v258
    %754 = vmatprep.subr.mxu0 0.0
    %755 = vmatpush1.msra.mxu0 %v259
    %756 = vmatprep.subr.mxu0 0.0
    %757 = vmatpush1.msra.mxu0 0.0
    %758 = vmatprep.subr.mxu0 0.0
    %759 = vmatpush1.msra.mxu0 0.0
    %760 = vmatprep.subr.mxu0 0.0
    %761 = vmatpush1.msra.mxu0 0.0
    %762 = vmatprep.subr.mxu0 0.0
    %763 = vmatpush1.msra.mxu0 0.0
    %764 = vmatprep.subr.mxu0 0.0
    %765 = vmatpush1.msra.mxu0 0.0
    %766 = vmatprep.subr.mxu0 0.0
    %767 = vmatpush1.msra.mxu0 0.0
    %768 = vmatprep.subr.mxu0 0.0
    %769 = vmatpush1.msra.mxu0 0.0
    %770 = vmatprep.subr.mxu0 0.0
    %771 = vmatpush1.msra.mxu0 0.0
    %772 = vmatprep.subr.mxu0 0.0
    %773 = vmatpush1.msra.mxu0 0.0
    %774 = vmatprep.subr.mxu0 0.0
    %775 = vmatpush1.msra.mxu0 0.0
    %776 = vmatprep.subr.mxu0 0.0
    %777 = vmatpush1.msra.mxu0 0.0
    %778 = vmatprep.subr.mxu0 0.0
    %779 = vmatpush1.msra.mxu0 0.0
    %780 = vmatprep.subr.mxu0 0.0
    %781 = vmatpush1.msra.mxu0 0.0
    %782 = vmatprep.subr.mxu0 0.0
    %783 = vmatpush1.msra.mxu0 0.0
    %784 = vmatprep.subr.mxu0 0.0
    %785 = vmatpush1.msra.mxu0 0.0
    %786 = vmatprep.subr.mxu0 0.0
    %787 = vmatpush1.msra.mxu0 0.0
    %788 = vmatprep.mubr.f32.mxu0 0.0
    %789 = vmatmul.mubr.f32.gmra.mrb[0].mxu0 %v192
    %v790 = vpop.f32.mrb[0].mxu0
    %v791 = vadd.f32 0.0, %v790
    %v792 = vpop.f32.mrb[0].mxu0
    %793 = vmatprep.mubr.f32.mxu0 0.0
    %794 = vmatmul.mubr.f32.gmra.mrb[0].mxu0 %v193
    %v795 = vpop.f32.mrb[0].mxu0
    %v796 = vadd.f32 0.0, %v795
    %v797 = vpop.f32.mrb[0].mxu0
    %798 = vdwg.mxu0
    %v799 = vsub.f32 %v716, %v791
    %v800 = vsub.f32 %v721, %v796
    %801 = vmatprep.subr.mxu0 0.0
    %802 = vmatpush1.msra.mxu0 %v228
    %803 = vmatprep.subr.mxu0 0.0
    %804 = vmatpush1.msra.mxu0 %v229
    %805 = vmatprep.subr.mxu0 0.0
    %806 = vmatpush1.msra.mxu0 %v230
    %807 = vmatprep.subr.mxu0 0.0
    %808 = vmatpush1.msra.mxu0 %v231
    %809 = vmatprep.subr.mxu0 0.0
    %810 = vmatpush1.msra.mxu0 %v232
    %811 = vmatprep.subr.mxu0 0.0
    %812 = vmatpush1.msra.mxu0 %v233
    %813 = vmatprep.subr.mxu0 0.0
    %814 = vmatpush1.msra.mxu0 %v234
    %815 = vmatprep.subr.mxu0 0.0
    %816 = vmatpush1.msra.mxu0 %v235
    %817 = vmatprep.subr.mxu0 0.0
    %818 = vmatpush1.msra.mxu0 %v236
    %819 = vmatprep.subr.mxu0 0.0
    %820 = vmatpush1.msra.mxu0 %v237
    %821 = vmatprep.subr.mxu0 0.0
    %822 = vmatpush1.msra.mxu0 %v238
    %823 = vmatprep.subr.mxu0 0.0
    %824 = vmatpush1.msra.mxu0 %v239
    %825 = vmatprep.subr.mxu0 0.0
    %826 = vmatpush1.msra.mxu0 %v240
    %827 = vmatprep.subr.mxu0 0.0
    %828 = vmatpush1.msra.mxu0 %v241
    %829 = vmatprep.subr.mxu0 0.0
    %830 = vmatpush1.msra.mxu0 %v242
    %831 = vmatprep.subr.mxu0 0.0
    %832 = vmatpush1.msra.mxu0 %v243
    %833 = vmatprep.subr.mxu0 0.0
    %834 = vmatpush1.msra.mxu0 0.0
    %835 = vmatprep.subr.mxu0 0.0
    %836 = vmatpush1.msra.mxu0 0.0
    %837 = vmatprep.subr.mxu0 0.0
    %838 = vmatpush1.msra.mxu0 0.0
    %839 = vmatprep.subr.mxu0 0.0
    %840 = vmatpush1.msra.mxu0 0.0
    %841 = vmatprep.subr.mxu0 0.0
    %842 = vmatpush1.msra.mxu0 0.0
    %843 = vmatprep.subr.mxu0 0.0
    %844 = vmatpush1.msra.mxu0 0.0
    %845 = vmatprep.subr.mxu0 0.0
    %846 = vmatpush1.msra.mxu0 0.0
    %847 = vmatprep.subr.mxu0 0.0
    %848 = vmatpush1.msra.mxu0 0.0
    %849 = vmatprep.subr.mxu0 0.0
    %850 = vmatpush1.msra.mxu0 0.0
    %851 = vmatprep.subr.mxu0 0.0
    %852 = vmatpush1.msra.mxu0 0.0
    %853 = vmatprep.subr.mxu0 0.0
    %854 = vmatpush1.msra.mxu0 0.0
    %855 = vmatprep.subr.mxu0 0.0
    %856 = vmatpush1.msra.mxu0 0.0
    %857 = vmatprep.subr.mxu0 0.0
    %858 = vmatpush1.msra.mxu0 0.0
    %859 = vmatprep.subr.mxu0 0.0
    %860 = vmatpush1.msra.mxu0 0.0
    %861 = vmatprep.subr.mxu0 0.0
    %862 = vmatpush1.msra.mxu0 0.0
    %863 = vmatprep.subr.mxu0 0.0
    %864 = vmatpush1.msra.mxu0 0.0
    %865 = vmatprep.mubr.f32.mxu0 0.0
    %866 = vmatmul.mubr.f32.gmra.mrb[0].mxu0 %v194
    %v867 = vpop.f32.mrb[0].mxu0
    %v868 = vadd.f32 0.0, %v867
    %v869 = vpop.f32.mrb[0].mxu0
    %870 = vmatprep.mubr.f32.mxu0 0.0
    %871 = vmatmul.mubr.f32.gmra.mrb[0].mxu0 %v195
    %v872 = vpop.f32.mrb[0].mxu0
    %v873 = vadd.f32 0.0, %v872
    %v874 = vpop.f32.mrb[0].mxu0
    %875 = vdwg.mxu0
    %v876 = vadd.f32 %v799, %v868
    %v877 = vadd.f32 %v800, %v873
    %v878 = vadd.f32 %v572, %v876
    %v879 = vadd.f32 %v573, %v877
    %880 = vst [vmem:[#allocation16 + $0x8] sm:$0xff] %v878
    %881 = vst [vmem:[#allocation16 + $0x28] sm:$0xff] %v879
    %v882 = vld [vmem:[#allocation16 + $0x10] sm:$0xff]
    %v883 = vld [vmem:[#allocation16 + $0x30] sm:$0xff]
    %884 = vmatprep.subr.mxu0 0.0
    %885 = vmatpush1.msra.mxu0 %v244
    %886 = vmatprep.subr.mxu0 0.0
    %887 = vmatpush1.msra.mxu0 %v245
    %888 = vmatprep.subr.mxu0 0.0
    %889 = vmatpush1.msra.mxu0 %v246
    %890 = vmatprep.subr.mxu0 0.0
    %891 = vmatpush1.msra.mxu0 %v247
    %892 = vmatprep.subr.mxu0 0.0
    %893 = vmatpush1.msra.mxu0 %v248
    %894 = vmatprep.subr.mxu0 0.0
    %895 = vmatpush1.msra.mxu0 %v249
    %896 = vmatprep.subr.mxu0 0.0
    %897 = vmatpush1.msra.mxu0 %v250
    %898 = vmatprep.subr.mxu0 0.0
    %899 = vmatpush1.msra.mxu0 %v251
    %900 = vmatprep.subr.mxu0 0.0
    %901 = vmatpush1.msra.mxu0 %v252
    %902 = vmatprep.subr.mxu0 0.0
    %903 = vmatpush1.msra.mxu0 %v253
    %904 = vmatprep.subr.mxu0 0.0
    %905 = vmatpush1.msra.mxu0 %v254
    %906 = vmatprep.subr.mxu0 0.0
    %907 = vmatpush1.msra.mxu0 %v255
    %908 = vmatprep.subr.mxu0 0.0
    %909 = vmatpush1.msra.mxu0 %v256
    %910 = vmatprep.subr.mxu0 0.0
    %911 = vmatpush1.msra.mxu0 %v257
    %912 = vmatprep.subr.mxu0 0.0
    %913 = vmatpush1.msra.mxu0 %v258
    %914 = vmatprep.subr.mxu0 0.0
    %915 = vmatpush1.msra.mxu0 %v259
    %916 = vmatprep.subr.mxu0 0.0
    %917 = vmatpush1.msra.mxu0 0.0
    %918 = vmatprep.subr.mxu0 0.0
    %919 = vmatpush1.msra.mxu0 0.0
    %920 = vmatprep.subr.mxu0 0.0
    %921 = vmatpush1.msra.mxu0 0.0
    %922 = vmatprep.subr.mxu0 0.0
    %923 = vmatpush1.msra.mxu0 0.0
    %924 = vmatprep.subr.mxu0 0.0
    %925 = vmatpush1.msra.mxu0 0.0
    %926 = vmatprep.subr.mxu0 0.0
    %927 = vmatpush1.msra.mxu0 0.0
    %928 = vmatprep.subr.mxu0 0.0
    %929 = vmatpush1.msra.mxu0 0.0
    %930 = vmatprep.subr.mxu0 0.0
    %931 = vmatpush1.msra.mxu0 0.0
    %932 = vmatprep.subr.mxu0 0.0
    %933 = vmatpush1.msra.mxu0 0.0
    %934 = vmatprep.subr.mxu0 0.0
    %935 = vmatpush1.msra.mxu0 0.0
    %936 = vmatprep.subr.mxu0 0.0
    %937 = vmatpush1.msra.mxu0 0.0
    %938 = vmatprep.subr.mxu0 0.0
    %939 = vmatpush1.msra.mxu0 0.0
    %940 = vmatprep.subr.mxu0 0.0
    %941 = vmatpush1.msra.mxu0 0.0
    %942 = vmatprep.subr.mxu0 0.0
    %943 = vmatpush1.msra.mxu0 0.0
    %944 = vmatprep.subr.mxu0 0.0
    %945 = vmatpush1.msra.mxu0 0.0
    %946 = vmatprep.subr.mxu0 0.0
    %947 = vmatpush1.msra.mxu0 0.0
    %948 = vmatprep.mubr.f32.mxu0 0.0
    %949 = vmatmul.mubr.f32.gmra.mrb[0].mxu0 %v190
    %v950 = vpop.f32.mrb[0].mxu0
    %v951 = vadd.f32 0.0, %v950
    %v952 = vpop.f32.mrb[0].mxu0
    %953 = vmatprep.mubr.f32.mxu0 0.0
    %954 = vmatmul.mubr.f32.gmra.mrb[0].mxu0 %v191
    %v955 = vpop.f32.mrb[0].mxu0
    %v956 = vadd.f32 0.0, %v955
    %v957 = vpop.f32.mrb[0].mxu0
    %958 = vdwg.mxu0
    %959 = vmatprep.subr.mxu0 0.0
    %960 = vmatpush1.msra.mxu0 %v228
    %961 = vmatprep.subr.mxu0 0.0
    %962 = vmatpush1.msra.mxu0 %v229
    %963 = vmatprep.subr.mxu0 0.0
    %964 = vmatpush1.msra.mxu0 %v230
    %965 = vmatprep.subr.mxu0 0.0
    %966 = vmatpush1.msra.mxu0 %v231
    %967 = vmatprep.subr.mxu0 0.0
    %968 = vmatpush1.msra.mxu0 %v232
    %969 = vmatprep.subr.mxu0 0.0
    %970 = vmatpush1.msra.mxu0 %v233
    %971 = vmatprep.subr.mxu0 0.0
    %972 = vmatpush1.msra.mxu0 %v234
    %973 = vmatprep.subr.mxu0 0.0
    %974 = vmatpush1.msra.mxu0 %v235
    %975 = vmatprep.subr.mxu0 0.0
    %976 = vmatpush1.msra.mxu0 %v236
    %977 = vmatprep.subr.mxu0 0.0
    %978 = vmatpush1.msra.mxu0 %v237
    %979 = vmatprep.subr.mxu0 0.0
    %980 = vmatpush1.msra.mxu0 %v238
    %981 = vmatprep.subr.mxu0 0.0
    %982 = vmatpush1.msra.mxu0 %v239
    %983 = vmatprep.subr.mxu0 0.0
    %984 = vmatpush1.msra.mxu0 %v240
    %985 = vmatprep.subr.mxu0 0.0
    %986 = vmatpush1.msra.mxu0 %v241
    %987 = vmatprep.subr.mxu0 0.0
    %988 = vmatpush1.msra.mxu0 %v242
    %989 = vmatprep.subr.mxu0 0.0
    %990 = vmatpush1.msra.mxu0 %v243
    %991 = vmatprep.subr.mxu0 0.0
    %992 = vmatpush1.msra.mxu0 0.0
    %993 = vmatprep.subr.mxu0 0.0
    %994 = vmatpush1.msra.mxu0 0.0
    %995 = vmatprep.subr.mxu0 0.0
    %996 = vmatpush1.msra.mxu0 0.0
    %997 = vmatprep.subr.mxu0 0.0
    %998 = vmatpush1.msra.mxu0 0.0
    %999 = vmatprep.subr.mxu0 0.0
    %1000 = vmatpush1.msra.mxu0 0.0
    %1001 = vmatprep.subr.mxu0 0.0
    %1002 = vmatpush1.msra.mxu0 0.0
    %1003 = vmatprep.subr.mxu0 0.0
    %1004 = vmatpush1.msra.mxu0 0.0
    %1005 = vmatprep.subr.mxu0 0.0
    %1006 = vmatpush1.msra.mxu0 0.0
    %1007 = vmatprep.subr.mxu0 0.0
    %1008 = vmatpush1.msra.mxu0 0.0
    %1009 = vmatprep.subr.mxu0 0.0
    %1010 = vmatpush1.msra.mxu0 0.0
    %1011 = vmatprep.subr.mxu0 0.0
    %1012 = vmatpush1.msra.mxu0 0.0
    %1013 = vmatprep.subr.mxu0 0.0
    %1014 = vmatpush1.msra.mxu0 0.0
    %1015 = vmatprep.subr.mxu0 0.0
    %1016 = vmatpush1.msra.mxu0 0.0
    %1017 = vmatprep.subr.mxu0 0.0
    %1018 = vmatpush1.msra.mxu0 0.0
    %1019 = vmatprep.subr.mxu0 0.0
    %1020 = vmatpush1.msra.mxu0 0.0
    %1021 = vmatprep.subr.mxu0 0.0
    %1022 = vmatpush1.msra.mxu0 0.0
    %1023 = vmatprep.mubr.f32.mxu0 0.0
    %1024 = vmatmul.mubr.f32.gmra.mrb[0].mxu0 %v188
    %v1025 = vpop.f32.mrb[0].mxu0
    %v1026 = vadd.f32 %v951, %v1025
    %v1027 = vpop.f32.mrb[0].mxu0
    %1028 = vmatprep.mubr.f32.mxu0 0.0
    %1029 = vmatmul.mubr.f32.gmra.mrb[0].mxu0 %v189
    %v1030 = vpop.f32.mrb[0].mxu0
    %v1031 = vadd.f32 %v956, %v1030
    %v1032 = vpop.f32.mrb[0].mxu0
    %1033 = vdwg.mxu0
    %1034 = vmatprep.subr.mxu0 0.0
    %1035 = vmatpush1.msra.mxu0 %v196
    %1036 = vmatprep.subr.mxu0 0.0
    %1037 = vmatpush1.msra.mxu0 %v197
    %1038 = vmatprep.subr.mxu0 0.0
    %1039 = vmatpush1.msra.mxu0 %v198
    %1040 = vmatprep.subr.mxu0 0.0
    %1041 = vmatpush1.msra.mxu0 %v199
    %1042 = vmatprep.subr.mxu0 0.0
    %1043 = vmatpush1.msra.mxu0 %v200
    %1044 = vmatprep.subr.mxu0 0.0
    %1045 = vmatpush1.msra.mxu0 %v201
    %1046 = vmatprep.subr.mxu0 0.0
    %1047 = vmatpush1.msra.mxu0 %v202
    %1048 = vmatprep.subr.mxu0 0.0
    %1049 = vmatpush1.msra.mxu0 %v203
    %1050 = vmatprep.subr.mxu0 0.0
    %1051 = vmatpush1.msra.mxu0 %v204
    %1052 = vmatprep.subr.mxu0 0.0
    %1053 = vmatpush1.msra.mxu0 %v205
    %1054 = vmatprep.subr.mxu0 0.0
    %1055 = vmatpush1.msra.mxu0 %v206
    %1056 = vmatprep.subr.mxu0 0.0
    %1057 = vmatpush1.msra.mxu0 %v207
    %1058 = vmatprep.subr.mxu0 0.0
    %1059 = vmatpush1.msra.mxu0 %v208
    %1060 = vmatprep.subr.mxu0 0.0
    %1061 = vmatpush1.msra.mxu0 %v209
    %1062 = vmatprep.subr.mxu0 0.0
    %1063 = vmatpush1.msra.mxu0 %v210
    %1064 = vmatprep.subr.mxu0 0.0
    %1065 = vmatpush1.msra.mxu0 %v211
    %1066 = vmatprep.subr.mxu0 0.0
    %1067 = vmatpush1.msra.mxu0 0.0
    %1068 = vmatprep.subr.mxu0 0.0
    %1069 = vmatpush1.msra.mxu0 0.0
    %1070 = vmatprep.subr.mxu0 0.0
    %1071 = vmatpush1.msra.mxu0 0.0
    %1072 = vmatprep.subr.mxu0 0.0
    %1073 = vmatpush1.msra.mxu0 0.0
    %1074 = vmatprep.subr.mxu0 0.0
    %1075 = vmatpush1.msra.mxu0 0.0
    %1076 = vmatprep.subr.mxu0 0.0
    %1077 = vmatpush1.msra.mxu0 0.0
    %1078 = vmatprep.subr.mxu0 0.0
    %1079 = vmatpush1.msra.mxu0 0.0
    %1080 = vmatprep.subr.mxu0 0.0
    %1081 = vmatpush1.msra.mxu0 0.0
    %1082 = vmatprep.subr.mxu0 0.0
    %1083 = vmatpush1.msra.mxu0 0.0
    %1084 = vmatprep.subr.mxu0 0.0
    %1085 = vmatpush1.msra.mxu0 0.0
    %1086 = vmatprep.subr.mxu0 0.0
    %1087 = vmatpush1.msra.mxu0 0.0
    %1088 = vmatprep.subr.mxu0 0.0
    %1089 = vmatpush1.msra.mxu0 0.0
    %1090 = vmatprep.subr.mxu0 0.0
    %1091 = vmatpush1.msra.mxu0 0.0
    %1092 = vmatprep.subr.mxu0 0.0
    %1093 = vmatpush1.msra.mxu0 0.0
    %1094 = vmatprep.subr.mxu0 0.0
    %1095 = vmatpush1.msra.mxu0 0.0
    %1096 = vmatprep.subr.mxu0 0.0
    %1097 = vmatpush1.msra.mxu0 0.0
    %1098 = vmatprep.mubr.f32.mxu0 0.0
    %1099 = vmatmul.mubr.f32.gmra.mrb[0].mxu0 %v192
    %v1100 = vpop.f32.mrb[0].mxu0
    %v1101 = vadd.f32 0.0, %v1100
    %v1102 = vpop.f32.mrb[0].mxu0
    %1103 = vmatprep.mubr.f32.mxu0 0.0
    %1104 = vmatmul.mubr.f32.gmra.mrb[0].mxu0 %v193
    %v1105 = vpop.f32.mrb[0].mxu0
    %v1106 = vadd.f32 0.0, %v1105
    %v1107 = vpop.f32.mrb[0].mxu0
    %1108 = vdwg.mxu0
    %v1109 = vadd.f32 %v1026, %v1101
    %v1110 = vadd.f32 %v1031, %v1106
    %1111 = vmatprep.subr.mxu0 0.0
    %1112 = vmatpush1.msra.mxu0 %v212
    %1113 = vmatprep.subr.mxu0 0.0
    %1114 = vmatpush1.msra.mxu0 %v213
    %1115 = vmatprep.subr.mxu0 0.0
    %1116 = vmatpush1.msra.mxu0 %v214
    %1117 = vmatprep.subr.mxu0 0.0
    %1118 = vmatpush1.msra.mxu0 %v215
    %1119 = vmatprep.subr.mxu0 0.0
    %1120 = vmatpush1.msra.mxu0 %v216
    %1121 = vmatprep.subr.mxu0 0.0
    %1122 = vmatpush1.msra.mxu0 %v217
    %1123 = vmatprep.subr.mxu0 0.0
    %1124 = vmatpush1.msra.mxu0 %v218
    %1125 = vmatprep.subr.mxu0 0.0
    %1126 = vmatpush1.msra.mxu0 %v219
    %1127 = vmatprep.subr.mxu0 0.0
    %1128 = vmatpush1.msra.mxu0 %v220
    %1129 = vmatprep.subr.mxu0 0.0
    %1130 = vmatpush1.msra.mxu0 %v221
    %1131 = vmatprep.subr.mxu0 0.0
    %1132 = vmatpush1.msra.mxu0 %v222
    %1133 = vmatprep.subr.mxu0 0.0
    %1134 = vmatpush1.msra.mxu0 %v223
    %1135 = vmatprep.subr.mxu0 0.0
    %1136 = vmatpush1.msra.mxu0 %v224
    %1137 = vmatprep.subr.mxu0 0.0
    %1138 = vmatpush1.msra.mxu0 %v225
    %1139 = vmatprep.subr.mxu0 0.0
    %1140 = vmatpush1.msra.mxu0 %v226
    %1141 = vmatprep.subr.mxu0 0.0
    %1142 = vmatpush1.msra.mxu0 %v227
    %1143 = vmatprep.subr.mxu0 0.0
    %1144 = vmatpush1.msra.mxu0 0.0
    %1145 = vmatprep.subr.mxu0 0.0
    %1146 = vmatpush1.msra.mxu0 0.0
    %1147 = vmatprep.subr.mxu0 0.0
    %1148 = vmatpush1.msra.mxu0 0.0
    %1149 = vmatprep.subr.mxu0 0.0
    %1150 = vmatpush1.msra.mxu0 0.0
    %1151 = vmatprep.subr.mxu0 0.0
    %1152 = vmatpush1.msra.mxu0 0.0
    %1153 = vmatprep.subr.mxu0 0.0
    %1154 = vmatpush1.msra.mxu0 0.0
    %1155 = vmatprep.subr.mxu0 0.0
    %1156 = vmatpush1.msra.mxu0 0.0
    %1157 = vmatprep.subr.mxu0 0.0
    %1158 = vmatpush1.msra.mxu0 0.0
    %1159 = vmatprep.subr.mxu0 0.0
    %1160 = vmatpush1.msra.mxu0 0.0
    %1161 = vmatprep.subr.mxu0 0.0
    %1162 = vmatpush1.msra.mxu0 0.0
    %1163 = vmatprep.subr.mxu0 0.0
    %1164 = vmatpush1.msra.mxu0 0.0
    %1165 = vmatprep.subr.mxu0 0.0
    %1166 = vmatpush1.msra.mxu0 0.0
    %1167 = vmatprep.subr.mxu0 0.0
    %1168 = vmatpush1.msra.mxu0 0.0
    %1169 = vmatprep.subr.mxu0 0.0
    %1170 = vmatpush1.msra.mxu0 0.0
    %1171 = vmatprep.subr.mxu0 0.0
    %1172 = vmatpush1.msra.mxu0 0.0
    %1173 = vmatprep.subr.mxu0 0.0
    %1174 = vmatpush1.msra.mxu0 0.0
    %1175 = vmatprep.mubr.f32.mxu0 0.0
    %1176 = vmatmul.mubr.f32.gmra.mrb[0].mxu0 %v194
    %v1177 = vpop.f32.mrb[0].mxu0
    %v1178 = vadd.f32 0.0, %v1177
    %v1179 = vpop.f32.mrb[0].mxu0
    %1180 = vmatprep.mubr.f32.mxu0 0.0
    %1181 = vmatmul.mubr.f32.gmra.mrb[0].mxu0 %v195
    %v1182 = vpop.f32.mrb[0].mxu0
    %v1183 = vadd.f32 0.0, %v1182
    %v1184 = vpop.f32.mrb[0].mxu0
    %1185 = vdwg.mxu0
    %v1186 = vsub.f32 %v1109, %v1178
    %v1187 = vsub.f32 %v1110, %v1183
    %v1188 = vadd.f32 %v882, %v1186
    %v1189 = vadd.f32 %v883, %v1187
    %1190 = vst [vmem:[#allocation16 + $0x10] sm:$0xff] %v1188
    %1191 = vst [vmem:[#allocation16 + $0x30] sm:$0xff] %v1189
    %v1192 = vld [vmem:[#allocation16 + $0x18] sm:$0xff]
    %v1193 = vld [vmem:[#allocation16 + $0x38] sm:$0xff]
    %1194 = vmatprep.subr.mxu0 0.0
    %1195 = vmatpush1.msra.mxu0 %v244
    %1196 = vmatprep.subr.mxu0 0.0
    %1197 = vmatpush1.msra.mxu0 %v245
    %1198 = vmatprep.subr.mxu0 0.0
    %1199 = vmatpush1.msra.mxu0 %v246
    %1200 = vmatprep.subr.mxu0 0.0
    %1201 = vmatpush1.msra.mxu0 %v247
    %1202 = vmatprep.subr.mxu0 0.0
    %1203 = vmatpush1.msra.mxu0 %v248
    %1204 = vmatprep.subr.mxu0 0.0
    %1205 = vmatpush1.msra.mxu0 %v249
    %1206 = vmatprep.subr.mxu0 0.0
    %1207 = vmatpush1.msra.mxu0 %v250
    %1208 = vmatprep.subr.mxu0 0.0
    %1209 = vmatpush1.msra.mxu0 %v251
    %1210 = vmatprep.subr.mxu0 0.0
    %1211 = vmatpush1.msra.mxu0 %v252
    %1212 = vmatprep.subr.mxu0 0.0
    %1213 = vmatpush1.msra.mxu0 %v253
    %1214 = vmatprep.subr.mxu0 0.0
    %1215 = vmatpush1.msra.mxu0 %v254
    %1216 = vmatprep.subr.mxu0 0.0
    %1217 = vmatpush1.msra.mxu0 %v255
    %1218 = vmatprep.subr.mxu0 0.0
    %1219 = vmatpush1.msra.mxu0 %v256
    %1220 = vmatprep.subr.mxu0 0.0
    %1221 = vmatpush1.msra.mxu0 %v257
    %1222 = vmatprep.subr.mxu0 0.0
    %1223 = vmatpush1.msra.mxu0 %v258
    %1224 = vmatprep.subr.mxu0 0.0
    %1225 = vmatpush1.msra.mxu0 %v259
    %1226 = vmatprep.subr.mxu0 0.0
    %1227 = vmatpush1.msra.mxu0 0.0
    %1228 = vmatprep.subr.mxu0 0.0
    %1229 = vmatpush1.msra.mxu0 0.0
    %1230 = vmatprep.subr.mxu0 0.0
    %1231 = vmatpush1.msra.mxu0 0.0
    %1232 = vmatprep.subr.mxu0 0.0
    %1233 = vmatpush1.msra.mxu0 0.0
    %1234 = vmatprep.subr.mxu0 0.0
    %1235 = vmatpush1.msra.mxu0 0.0
    %1236 = vmatprep.subr.mxu0 0.0
    %1237 = vmatpush1.msra.mxu0 0.0
    %1238 = vmatprep.subr.mxu0 0.0
    %1239 = vmatpush1.msra.mxu0 0.0
    %1240 = vmatprep.subr.mxu0 0.0
    %1241 = vmatpush1.msra.mxu0 0.0
    %1242 = vmatprep.subr.mxu0 0.0
    %1243 = vmatpush1.msra.mxu0 0.0
    %1244 = vmatprep.subr.mxu0 0.0
    %1245 = vmatpush1.msra.mxu0 0.0
    %1246 = vmatprep.subr.mxu0 0.0
    %1247 = vmatpush1.msra.mxu0 0.0
    %1248 = vmatprep.subr.mxu0 0.0
    %1249 = vmatpush1.msra.mxu0 0.0
    %1250 = vmatprep.subr.mxu0 0.0
    %1251 = vmatpush1.msra.mxu0 0.0
    %1252 = vmatprep.subr.mxu0 0.0
    %1253 = vmatpush1.msra.mxu0 0.0
    %1254 = vmatprep.subr.mxu0 0.0
    %1255 = vmatpush1.msra.mxu0 0.0
    %1256 = vmatprep.subr.mxu0 0.0
    %1257 = vmatpush1.msra.mxu0 0.0
    %1258 = vmatprep.mubr.f32.mxu0 0.0
    %1259 = vmatmul.mubr.f32.gmra.mrb[0].mxu0 %v188
    %v1260 = vpop.f32.mrb[0].mxu0
    %v1261 = vadd.f32 0.0, %v1260
    %v1262 = vpop.f32.mrb[0].mxu0
    %1263 = vmatprep.mubr.f32.mxu0 0.0
    %1264 = vmatmul.mubr.f32.gmra.mrb[0].mxu0 %v189
    %v1265 = vpop.f32.mrb[0].mxu0
    %v1266 = vadd.f32 0.0, %v1265
    %v1267 = vpop.f32.mrb[0].mxu0
    %1268 = vdwg.mxu0
    %1269 = vmatprep.subr.mxu0 0.0
    %1270 = vmatpush1.msra.mxu0 %v228
    %1271 = vmatprep.subr.mxu0 0.0
    %1272 = vmatpush1.msra.mxu0 %v229
    %1273 = vmatprep.subr.mxu0 0.0
    %1274 = vmatpush1.msra.mxu0 %v230
    %1275 = vmatprep.subr.mxu0 0.0
    %1276 = vmatpush1.msra.mxu0 %v231
    %1277 = vmatprep.subr.mxu0 0.0
    %1278 = vmatpush1.msra.mxu0 %v232
    %1279 = vmatprep.subr.mxu0 0.0
    %1280 = vmatpush1.msra.mxu0 %v233
    %1281 = vmatprep.subr.mxu0 0.0
    %1282 = vmatpush1.msra.mxu0 %v234
    %1283 = vmatprep.subr.mxu0 0.0
    %1284 = vmatpush1.msra.mxu0 %v235
    %1285 = vmatprep.subr.mxu0 0.0
    %1286 = vmatpush1.msra.mxu0 %v236
    %1287 = vmatprep.subr.mxu0 0.0
    %1288 = vmatpush1.msra.mxu0 %v237
    %1289 = vmatprep.subr.mxu0 0.0
    %1290 = vmatpush1.msra.mxu0 %v238
    %1291 = vmatprep.subr.mxu0 0.0
    %1292 = vmatpush1.msra.mxu0 %v239
    %1293 = vmatprep.subr.mxu0 0.0
    %1294 = vmatpush1.msra.mxu0 %v240
    %1295 = vmatprep.subr.mxu0 0.0
    %1296 = vmatpush1.msra.mxu0 %v241
    %1297 = vmatprep.subr.mxu0 0.0
    %1298 = vmatpush1.msra.mxu0 %v242
    %1299 = vmatprep.subr.mxu0 0.0
    %1300 = vmatpush1.msra.mxu0 %v243
    %1301 = vmatprep.subr.mxu0 0.0
    %1302 = vmatpush1.msra.mxu0 0.0
    %1303 = vmatprep.subr.mxu0 0.0
    %1304 = vmatpush1.msra.mxu0 0.0
    %1305 = vmatprep.subr.mxu0 0.0
    %1306 = vmatpush1.msra.mxu0 0.0
    %1307 = vmatprep.subr.mxu0 0.0
    %1308 = vmatpush1.msra.mxu0 0.0
    %1309 = vmatprep.subr.mxu0 0.0
    %1310 = vmatpush1.msra.mxu0 0.0
    %1311 = vmatprep.subr.mxu0 0.0
    %1312 = vmatpush1.msra.mxu0 0.0
    %1313 = vmatprep.subr.mxu0 0.0
    %1314 = vmatpush1.msra.mxu0 0.0
    %1315 = vmatprep.subr.mxu0 0.0
    %1316 = vmatpush1.msra.mxu0 0.0
    %1317 = vmatprep.subr.mxu0 0.0
    %1318 = vmatpush1.msra.mxu0 0.0
    %1319 = vmatprep.subr.mxu0 0.0
    %1320 = vmatpush1.msra.mxu0 0.0
    %1321 = vmatprep.subr.mxu0 0.0
    %1322 = vmatpush1.msra.mxu0 0.0
    %1323 = vmatprep.subr.mxu0 0.0
    %1324 = vmatpush1.msra.mxu0 0.0
    %1325 = vmatprep.subr.mxu0 0.0
    %1326 = vmatpush1.msra.mxu0 0.0
    %1327 = vmatprep.subr.mxu0 0.0
    %1328 = vmatpush1.msra.mxu0 0.0
    %1329 = vmatprep.subr.mxu0 0.0
    %1330 = vmatpush1.msra.mxu0 0.0
    %1331 = vmatprep.subr.mxu0 0.0
    %1332 = vmatpush1.msra.mxu0 0.0
    %1333 = vmatprep.mubr.f32.mxu0 0.0
    %1334 = vmatmul.mubr.f32.gmra.mrb[0].mxu0 %v190
    %v1335 = vpop.f32.mrb[0].mxu0
    %v1336 = vadd.f32 0.0, %v1335
    %v1337 = vpop.f32.mrb[0].mxu0
    %1338 = vmatprep.mubr.f32.mxu0 0.0
    %1339 = vmatmul.mubr.f32.gmra.mrb[0].mxu0 %v191
    %v1340 = vpop.f32.mrb[0].mxu0
    %v1341 = vadd.f32 0.0, %v1340
    %v1342 = vpop.f32.mrb[0].mxu0
    %1343 = vdwg.mxu0
    %v1344 = vsub.f32 %v1261, %v1336
    %v1345 = vsub.f32 %v1266, %v1341
    %1346 = vmatprep.subr.mxu0 0.0
    %1347 = vmatpush1.msra.mxu0 %v212
    %1348 = vmatprep.subr.mxu0 0.0
    %1349 = vmatpush1.msra.mxu0 %v213
    %1350 = vmatprep.subr.mxu0 0.0
    %1351 = vmatpush1.msra.mxu0 %v214
    %1352 = vmatprep.subr.mxu0 0.0
    %1353 = vmatpush1.msra.mxu0 %v215
    %1354 = vmatprep.subr.mxu0 0.0
    %1355 = vmatpush1.msra.mxu0 %v216
    %1356 = vmatprep.subr.mxu0 0.0
    %1357 = vmatpush1.msra.mxu0 %v217
    %1358 = vmatprep.subr.mxu0 0.0
    %1359 = vmatpush1.msra.mxu0 %v218
    %1360 = vmatprep.subr.mxu0 0.0
    %1361 = vmatpush1.msra.mxu0 %v219
    %1362 = vmatprep.subr.mxu0 0.0
    %1363 = vmatpush1.msra.mxu0 %v220
    %1364 = vmatprep.subr.mxu0 0.0
    %1365 = vmatpush1.msra.mxu0 %v221
    %1366 = vmatprep.subr.mxu0 0.0
    %1367 = vmatpush1.msra.mxu0 %v222
    %1368 = vmatprep.subr.mxu0 0.0
    %1369 = vmatpush1.msra.mxu0 %v223
    %1370 = vmatprep.subr.mxu0 0.0
    %1371 = vmatpush1.msra.mxu0 %v224
    %1372 = vmatprep.subr.mxu0 0.0
    %1373 = vmatpush1.msra.mxu0 %v225
    %1374 = vmatprep.subr.mxu0 0.0
    %1375 = vmatpush1.msra.mxu0 %v226
    %1376 = vmatprep.subr.mxu0 0.0
    %1377 = vmatpush1.msra.mxu0 %v227
    %1378 = vmatprep.subr.mxu0 0.0
    %1379 = vmatpush1.msra.mxu0 0.0
    %1380 = vmatprep.subr.mxu0 0.0
    %1381 = vmatpush1.msra.mxu0 0.0
    %1382 = vmatprep.subr.mxu0 0.0
    %1383 = vmatpush1.msra.mxu0 0.0
    %1384 = vmatprep.subr.mxu0 0.0
    %1385 = vmatpush1.msra.mxu0 0.0
    %1386 = vmatprep.subr.mxu0 0.0
    %1387 = vmatpush1.msra.mxu0 0.0
    %1388 = vmatprep.subr.mxu0 0.0
    %1389 = vmatpush1.msra.mxu0 0.0
    %1390 = vmatprep.subr.mxu0 0.0
    %1391 = vmatpush1.msra.mxu0 0.0
    %1392 = vmatprep.subr.mxu0 0.0
    %1393 = vmatpush1.msra.mxu0 0.0
    %1394 = vmatprep.subr.mxu0 0.0
    %1395 = vmatpush1.msra.mxu0 0.0
    %1396 = vmatprep.subr.mxu0 0.0
    %1397 = vmatpush1.msra.mxu0 0.0
    %1398 = vmatprep.subr.mxu0 0.0
    %1399 = vmatpush1.msra.mxu0 0.0
    %1400 = vmatprep.subr.mxu0 0.0
    %1401 = vmatpush1.msra.mxu0 0.0
    %1402 = vmatprep.subr.mxu0 0.0
    %1403 = vmatpush1.msra.mxu0 0.0
    %1404 = vmatprep.subr.mxu0 0.0
    %1405 = vmatpush1.msra.mxu0 0.0
    %1406 = vmatprep.subr.mxu0 0.0
    %1407 = vmatpush1.msra.mxu0 0.0
    %1408 = vmatprep.subr.mxu0 0.0
    %1409 = vmatpush1.msra.mxu0 0.0
    %1410 = vmatprep.mubr.f32.mxu0 0.0
    %1411 = vmatmul.mubr.f32.gmra.mrb[0].mxu0 %v192
    %v1412 = vpop.f32.mrb[0].mxu0
    %v1413 = vadd.f32 0.0, %v1412
    %v1414 = vpop.f32.mrb[0].mxu0
    %1415 = vmatprep.mubr.f32.mxu0 0.0
    %1416 = vmatmul.mubr.f32.gmra.mrb[0].mxu0 %v193
    %v1417 = vpop.f32.mrb[0].mxu0
    %v1418 = vadd.f32 0.0, %v1417
    %v1419 = vpop.f32.mrb[0].mxu0
    %1420 = vdwg.mxu0
    %v1421 = vadd.f32 %v1344, %v1413
    %v1422 = vadd.f32 %v1345, %v1418
    %1423 = vmatprep.subr.mxu0 0.0
    %1424 = vmatpush1.msra.mxu0 %v196
    %1425 = vmatprep.subr.mxu0 0.0
    %1426 = vmatpush1.msra.mxu0 %v197
    %1427 = vmatprep.subr.mxu0 0.0
    %1428 = vmatpush1.msra.mxu0 %v198
    %1429 = vmatprep.subr.mxu0 0.0
    %1430 = vmatpush1.msra.mxu0 %v199
    %1431 = vmatprep.subr.mxu0 0.0
    %1432 = vmatpush1.msra.mxu0 %v200
    %1433 = vmatprep.subr.mxu0 0.0
    %1434 = vmatpush1.msra.mxu0 %v201
    %1435 = vmatprep.subr.mxu0 0.0
    %1436 = vmatpush1.msra.mxu0 %v202
    %1437 = vmatprep.subr.mxu0 0.0
    %1438 = vmatpush1.msra.mxu0 %v203
    %1439 = vmatprep.subr.mxu0 0.0
    %1440 = vmatpush1.msra.mxu0 %v204
    %1441 = vmatprep.subr.mxu0 0.0
    %1442 = vmatpush1.msra.mxu0 %v205
    %1443 = vmatprep.subr.mxu0 0.0
    %1444 = vmatpush1.msra.mxu0 %v206
    %1445 = vmatprep.subr.mxu0 0.0
    %1446 = vmatpush1.msra.mxu0 %v207
    %1447 = vmatprep.subr.mxu0 0.0
    %1448 = vmatpush1.msra.mxu0 %v208
    %1449 = vmatprep.subr.mxu0 0.0
    %1450 = vmatpush1.msra.mxu0 %v209
    %1451 = vmatprep.subr.mxu0 0.0
    %1452 = vmatpush1.msra.mxu0 %v210
    %1453 = vmatprep.subr.mxu0 0.0
    %1454 = vmatpush1.msra.mxu0 %v211
    %1455 = vmatprep.subr.mxu0 0.0
    %1456 = vmatpush1.msra.mxu0 0.0
    %1457 = vmatprep.subr.mxu0 0.0
    %1458 = vmatpush1.msra.mxu0 0.0
    %1459 = vmatprep.subr.mxu0 0.0
    %1460 = vmatpush1.msra.mxu0 0.0
    %1461 = vmatprep.subr.mxu0 0.0
    %1462 = vmatpush1.msra.mxu0 0.0
    %1463 = vmatprep.subr.mxu0 0.0
    %1464 = vmatpush1.msra.mxu0 0.0
    %1465 = vmatprep.subr.mxu0 0.0
    %1466 = vmatpush1.msra.mxu0 0.0
    %1467 = vmatprep.subr.mxu0 0.0
    %1468 = vmatpush1.msra.mxu0 0.0
    %1469 = vmatprep.subr.mxu0 0.0
    %1470 = vmatpush1.msra.mxu0 0.0
    %1471 = vmatprep.subr.mxu0 0.0
    %1472 = vmatpush1.msra.mxu0 0.0
    %1473 = vmatprep.subr.mxu0 0.0
    %1474 = vmatpush1.msra.mxu0 0.0
    %1475 = vmatprep.subr.mxu0 0.0
    %1476 = vmatpush1.msra.mxu0 0.0
    %1477 = vmatprep.subr.mxu0 0.0
    %1478 = vmatpush1.msra.mxu0 0.0
    %1479 = vmatprep.subr.mxu0 0.0
    %1480 = vmatpush1.msra.mxu0 0.0
    %1481 = vmatprep.subr.mxu0 0.0
    %1482 = vmatpush1.msra.mxu0 0.0
    %1483 = vmatprep.subr.mxu0 0.0
    %1484 = vmatpush1.msra.mxu0 0.0
    %1485 = vmatprep.subr.mxu0 0.0
    %1486 = vmatpush1.msra.mxu0 0.0
    %1487 = vmatprep.mubr.f32.mxu0 0.0
    %1488 = vmatmul.mubr.f32.gmra.mrb[0].mxu0 %v194
    %v1489 = vpop.f32.mrb[0].mxu0
    %v1490 = vadd.f32 0.0, %v1489
    %v1491 = vpop.f32.mrb[0].mxu0
    %1492 = vmatprep.mubr.f32.mxu0 0.0
    %1493 = vmatmul.mubr.f32.gmra.mrb[0].mxu0 %v195
    %v1494 = vpop.f32.mrb[0].mxu0
    %v1495 = vadd.f32 0.0, %v1494
    %v1496 = vpop.f32.mrb[0].mxu0
    %1497 = vdwg.mxu0
    %v1498 = vadd.f32 %v1421, %v1490
    %v1499 = vadd.f32 %v1422, %v1495
    %v1500 = vadd.f32 %v1192, %v1498
    %v1501 = vadd.f32 %v1193, %v1499
    %1502 = vst [vmem:[#allocation16 + $0x18] sm:$0xff] %v1500
    %1503 = vst [vmem:[#allocation16 + $0x38] sm:$0xff] %v1501
    // Predicated region
    $region74: #{tpu_custom_call.1} parent=1 // pred_check
      _
    $region75: #{tpu_custom_call.1} parent=1 // pred_check_branch
      %1505 = sbr.rel (0) target = $region77
    $region76: #{tpu_custom_call.1} parent=1 // pred_region
      %s1507 = ssub.s32 1024, 1024
      %1508 = vsyncadd [#allocation4], %s1507
      %s1509 = sshll.u32 [#allocation16], 4
      %s1510 = int_to_ptr.vmem [resolvable:$true] %s1509
      %1515 = dma.vmem_to_hbm [thread:$0]  %s1510, 1024, %s9, [#allocation4], 512, 512, 32
    $region77: #{tpu_custom_call.1} parent=1 // pred_fallthru
      _
    // Predicated region
    $region78: #{tpu_custom_call.1} parent=1 // pred_check
      _
    $region79: #{tpu_custom_call.1} parent=1 // pred_check_branch
      %1517 = sbr.rel (0) target = $region81
    $region80: #{tpu_custom_call.1} parent=1 // pred_region
      %1518 = dma.done [#allocation4], 1024
    $region81: #{tpu_custom_call.1} parent=1 // pred_fallthru
      _
    %1519 = vsyncpa [#allocation3], 1
    %1520 = vsyncpa [#allocation6], 1
    %1521 = vsyncpa [#allocation9], 1
    %1522 = vsyncpa [#allocation12], 1
    %1523 = vsyncpa [#allocation15], 1
    %1524 = vsyncpa [#allocation4], 1

</llo_original>
